<compile_context>
chip_gen: v7x
topology: tpu7x:2x2x1
jax: 0.10.0
libtpu: 0.0.40
codegen_flags: <defaults>
</compile_context>

<pallas_src>
import functools
import math

import jax
import jax.numpy as jnp
from jax import lax
from jax.experimental import pallas as pl
from jax.experimental.pallas import tpu as pltpu


_VMEM_LIMIT = 32 * 1024 * 1024  # explicit scoped-VMEM budget, safe on v5e/v6e/v7x


def _pick_tile(n, preferred):
    """Largest preferred tile that evenly divides n (falls back to n)."""
    for t in preferred:
        if t <= n and n % t == 0:
            return t
    return n


# --------------------- kernel 1: GroupNorm + q/k/v projection ---------------------

def _gn_qkv_kernel(x_ref, qc_ref, kc_ref, gamma_ref, beta_ref, gmap_ref,
                   wh_ref, wqc_ref, wkc_ref, bias_ref,
                   q_out, k_out, v_out, *, eps, inv_count, ec):
    xs = x_ref[0]                                            # (HW, C) f32
    # ---- GroupNorm statistics (f32): per-channel sums -> per-group via tiny matmuls ----
    s1 = jnp.sum(xs, axis=0, keepdims=True)                  # (1, C)
    s2 = jnp.sum(xs * xs, axis=0, keepdims=True)             # (1, C)
    gmap = gmap_ref[...]                                     # (C, G) one-hot group map
    gmu = jnp.dot(s1, gmap, preferred_element_type=jnp.float32) * inv_count   # (1, G)
    gm2 = jnp.dot(s2, gmap, preferred_element_type=jnp.float32) * inv_count   # (1, G)
    ginv = lax.rsqrt(gm2 - gmu * gmu + eps)                  # (1, G)  (biased var, torch GN)
    dims = (((1,), (1,)), ((), ()))                          # contract over G -> channels
    mu_c = lax.dot_general(gmu, gmap, dims, preferred_element_type=jnp.float32)   # (1, C)
    inv_c = lax.dot_general(ginv, gmap, dims, preferred_element_type=jnp.float32)  # (1, C)
    scale = gamma_ref[...] * inv_c
    shift = beta_ref[...] - mu_c * scale
    hn = (xs * scale + shift).astype(jnp.bfloat16)           # (HW, C) GroupNorm output

    # ---- fused q/k/v projections (bf16 MXU inputs, f32 accumulation) ----
    base = jnp.dot(hn, wh_ref[...], preferred_element_type=jnp.float32)        # (HW, 3*E*C)
    qadd = jnp.dot(qc_ref[0], wqc_ref[...], preferred_element_type=jnp.float32)   # (HW, E*C)
    kvadd = jnp.dot(kc_ref[0], wkc_ref[...], preferred_element_type=jnp.float32)  # (HW, 2*E*C)
    qkv = base + jnp.concatenate([qadd, kvadd], axis=-1) + bias_ref[...]
    q_out[0] = qkv[:, :ec].astype(q_out.dtype)
    k_out[0] = qkv[:, ec:2 * ec].astype(k_out.dtype)
    v_out[0] = qkv[:, 2 * ec:].astype(v_out.dtype)


def fused_groupnorm_qkv(x_tok, q_cond_tok, k_cond_tok, gamma, beta,
                        Wh, Wqc, Wkc, bias, *, num_groups, eps=1e-6):
    B, HW, C = x_tok.shape
    CC = q_cond_tok.shape[-1]
    EC3 = Wh.shape[1]
    EC = EC3 // 3
    G = num_groups
    cpg = C // G
    gmap = (jnp.arange(C)[:, None] // cpg == jnp.arange(G)[None, :]).astype(jnp.float32)

    kernel = functools.partial(_gn_qkv_kernel, eps=eps,
                               inv_count=1.0 / float(HW * cpg), ec=EC)
    out_spec = pl.BlockSpec((1, HW, EC), lambda b: (b, 0, 0))
    out_sd = jax.ShapeDtypeStruct((B, HW, EC), jnp.bfloat16)
    return pl.pallas_call(
        kernel,
        out_shape=(out_sd, out_sd, out_sd),
        grid=(B,),
        in_specs=[
            pl.BlockSpec((1, HW, C), lambda b: (b, 0, 0)),
            pl.BlockSpec((1, HW, CC), lambda b: (b, 0, 0)),
            pl.BlockSpec((1, HW, CC), lambda b: (b, 0, 0)),
            pl.BlockSpec((1, C), lambda b: (0, 0)),
            pl.BlockSpec((1, C), lambda b: (0, 0)),
            pl.BlockSpec((C, G), lambda b: (0, 0)),
            pl.BlockSpec((C, EC3), lambda b: (0, 0)),
            pl.BlockSpec((CC, EC), lambda b: (0, 0)),
            pl.BlockSpec((CC, 2 * EC), lambda b: (0, 0)),
            pl.BlockSpec((1, EC3), lambda b: (0, 0)),
        ],
        out_specs=(out_spec, out_spec, out_spec),
        compiler_params=pltpu.CompilerParams(
            dimension_semantics=("parallel",),
            vmem_limit_bytes=_VMEM_LIMIT),
    )(x_tok, q_cond_tok, k_cond_tok, gamma, beta, gmap, Wh, Wqc, Wkc, bias)


# --------------------- kernel 2: flash-style paired cross attention ---------------------

def _cross_attn_kernel(q_ref, k_ref, v_ref, o_ref, m_sc, l_sc, acc_sc,
                       *, n_heads, head_dim, scale):
    kv = pl.program_id(2)

    @pl.when(kv == 0)
    def _():
        m_sc[...] = jnp.full(m_sc.shape, -jnp.inf, dtype=m_sc.dtype)
        l_sc[...] = jnp.zeros(l_sc.shape, dtype=l_sc.dtype)
        acc_sc[...] = jnp.zeros(acc_sc.shape, dtype=acc_sc.dtype)

    q = q_ref[0]                                             # (TQ, E*C) bf16
    k = k_ref[0]                                             # (TK, E*C) bf16
    v = v_ref[0]
    C = head_dim
    for e in range(n_heads):                                 # static unroll over heads
        qe = q[:, e * C:(e + 1) * C]
        ke = k[:, e * C:(e + 1) * C]
        ve = v[:, e * C:(e + 1) * C]
        s = lax.dot_general(qe, ke, (((1,), (1,)), ((), ())),
                            preferred_element_type=jnp.float32) * scale   # (TQ, TK) f32
        m_prev = m_sc[e]                                     # (TQ, 1)
        m_new = jnp.maximum(m_prev, jnp.max(s, axis=-1, keepdims=True))
        alpha = jnp.exp(m_prev - m_new)                      # softmax math stays f32
        p = jnp.exp(s - m_new)
        l_sc[e] = alpha * l_sc[e] + jnp.sum(p, axis=-1, keepdims=True)
        acc_sc[e] = alpha * acc_sc[e] + jnp.dot(p.astype(jnp.bfloat16), ve,
                                                preferred_element_type=jnp.float32)
        m_sc[e] = m_new

    @pl.when(kv == pl.num_programs(2) - 1)
    def _():
        outs = [acc_sc[e] * pl.reciprocal(l_sc[e], approx=True)
                for e in range(n_heads)]
        o_ref[0] = jnp.concatenate(outs, axis=-1).astype(o_ref.dtype)


def cross_attention(q, k, v, *, n_heads, head_dim):
    # q/k/v: (B, HW, E*C) bf16.  Output row b attends q[b] against k/v of its pair partner.
    B, HW, EC = q.shape
    TQ = _pick_tile(HW, (256, 128, 64, 32, 16, 8))
    TK = _pick_tile(HW, (512, 256, 128, 64, 32, 16, 8))
    scale = float(head_dim) ** (-0.5)
    kernel = functools.partial(_cross_attn_kernel, n_heads=n_heads,
                               head_dim=head_dim, scale=scale)

    def partner(b):
        # paired batch element: 2p <-> 2p+1 (direction a attends to b and vice versa)
        return b + 1 - 2 * (b % 2)

    q_spec = pl.BlockSpec((1, TQ, EC), lambda b, qi, ki: (b, qi, 0))
    kv_spec = pl.BlockSpec((1, TK, EC), lambda b, qi, ki: (partner(b), ki, 0))
    return pl.pallas_call(
        kernel,
        out_shape=jax.ShapeDtypeStruct((B, HW, EC), jnp.bfloat16),
        grid=(B, HW // TQ, HW // TK),
        in_specs=[q_spec, kv_spec, kv_spec],
        out_specs=pl.BlockSpec((1, TQ, EC), lambda b, qi, ki: (b, qi, 0)),
        scratch_shapes=[
            pltpu.VMEM((n_heads, TQ, 1), jnp.float32),          # running max m
            pltpu.VMEM((n_heads, TQ, 1), jnp.float32),          # running sum l
            pltpu.VMEM((n_heads, TQ, head_dim), jnp.float32),   # output accumulator
        ],
        compiler_params=pltpu.CompilerParams(
            dimension_semantics=("parallel", "parallel", "arbitrary"),
            vmem_limit_bytes=_VMEM_LIMIT),
    )(q, k, v)


# --------------------- kernel 3: output projection + residual ---------------------

def _out_proj_kernel(h_ref, x_ref, w_ref, b_ref, o_ref, *, res_scale):
    proj = jnp.dot(h_ref[...], w_ref[...],
                   preferred_element_type=jnp.float32) + b_ref[...]
    out = x_ref[...] + proj                                  # fused residual add
    if res_scale != 1.0:
        out = out * res_scale
    o_ref[...] = out


def out_proj_residual(h_flat, x_flat, W3, b3, *, skip_rescale):
    N, EC = h_flat.shape
    C = W3.shape[1]
    TN = _pick_tile(N, (1024, 512, 256, 128, 64, 32, 16, 8))
    res_scale = (1.0 / math.sqrt(2.0)) if skip_rescale else 1.0
    kernel = functools.partial(_out_proj_kernel, res_scale=res_scale)
    return pl.pallas_call(
        kernel,
        out_shape=jax.ShapeDtypeStruct((N, C), jnp.float32),
        grid=(N // TN,),
        in_specs=[
            pl.BlockSpec((TN, EC), lambda i: (i, 0)),
            pl.BlockSpec((TN, C), lambda i: (i, 0)),
            pl.BlockSpec((EC, C), lambda i: (0, 0)),
            pl.BlockSpec((1, C), lambda i: (0, 0)),
        ],
        out_specs=pl.BlockSpec((TN, C), lambda i: (i, 0)),
        compiler_params=pltpu.CompilerParams(
            dimension_semantics=("parallel",),
            vmem_limit_bytes=_VMEM_LIMIT),
    )(h_flat, x_flat, W3, b3)


# ------------------------------- module wrapper -------------------------------

def init_params(key, channels, cond_chans, n_heads):
    C, CC, E = channels, cond_chans, n_heads
    ks = jax.random.split(key, 10)

    def w(k, shape, scale):
        return scale * jax.random.normal(k, shape, dtype=jnp.float32)

    return dict(
        num_groups=min(C // 4, 32),
        gn_gamma=1.0 + 0.1 * jax.random.normal(ks[0], (C,), jnp.float32),
        gn_beta=0.1 * jax.random.normal(ks[1], (C,), jnp.float32),
        W0=w(ks[2], (C + CC, C * E), (C + CC) ** -0.5),
        b0=w(ks[3], (C * E,), 0.1),
        W1=w(ks[4], (C + CC, C * E), (C + CC) ** -0.5),
        b1=w(ks[5], (C * E,), 0.1),
        W2=w(ks[6], (C + CC, C * E), (C + CC) ** -0.5),
        b2=w(ks[7], (C * E,), 0.1),
        # TODO(synk): NIN_3 uses init_scale=0.0 in the torch module; a small non-zero
        # random init is used here so the numeric check is non-trivial.
        W3=w(ks[8], (C * E, C), 0.1 * (C * E) ** -0.5),
        b3=w(ks[9], (C,), 0.1),
    )


def cross_attn_blockpp_forward(params, x, q_cond, k_a_cond, k_b_cond,
                               *, n_heads, skip_rescale=False):
    B, C, H, W = x.shape
    assert B % 2 == 0, "batch must consist of ray pairs"
    CC = q_cond.shape[1]
    HW = H * W
    E = n_heads
    EC = E * C

    # ---- entry layout change (single pass): NCHW -> channels-last tokens ----
    x_tok = jnp.transpose(x, (0, 2, 3, 1)).reshape(B, HW, C).astype(jnp.float32)

    def to_tok(t):
        return jnp.transpose(t, (0, 2, 3, 1)).reshape(B // 2, HW, CC)

    qc, ka, kb = to_tok(q_cond), to_tok(k_a_cond), to_tok(k_b_cond)
    # stack_rays: interleave cond maps so each paired batch element sees its own cond
    q_st = jnp.stack([qc, qc], axis=1).reshape(B, HW, CC).astype(jnp.bfloat16)
    k_st = jnp.stack([ka, kb], axis=1).reshape(B, HW, CC).astype(jnp.bfloat16)

    # ---- fuse + cast projection weights (tiny, XLA side) ----
    W0, W1, W2 = params["W0"], params["W1"], params["W2"]
    Wh = jnp.concatenate([W0[:C], W1[:C], W2[:C]], axis=1).astype(jnp.bfloat16)   # (C, 3EC)
    Wqc = W0[C:].astype(jnp.bfloat16)                                             # (CC, EC)
    Wkc = jnp.concatenate([W1[C:], W2[C:]], axis=1).astype(jnp.bfloat16)          # (CC, 2EC)
    b_qkv = jnp.concatenate([params["b0"], params["b1"], params["b2"]]).reshape(1, 3 * EC)
    gamma = params["gn_gamma"].reshape(1, C).astype(jnp.float32)
    beta = params["gn_beta"].reshape(1, C).astype(jnp.float32)

    # ---- kernel 1: GroupNorm fused with q/k/v projections ----
    q, k, v = fused_groupnorm_qkv(x_tok, q_st, k_st, gamma, beta,
                                  Wh, Wqc, Wkc, b_qkv,
                                  num_groups=params["num_groups"], eps=1e-6)

    # ---- kernel 2: paired cross attention (flash-style, partner via index_map) ----
    h_att = cross_attention(q, k, v, n_heads=E, head_dim=C)          # (B, HW, E*C) bf16

    # ---- kernel 3: output projection fused with residual add ----
    W3 = params["W3"].astype(jnp.bfloat16)
    b3 = params["b3"].reshape(1, C).astype(jnp.float32)
    out_tok = out_proj_residual(h_att.reshape(B * HW, EC),
                                x_tok.reshape(B * HW, C),
                                W3, b3, skip_rescale=skip_rescale)   # (B*HW, C) f32

    # ---- exit layout change (single pass): tokens -> NCHW ----
    return out_tok.reshape(B, H, W, C).transpose(0, 3, 1, 2)


# ------------------------------ pure-JAX reference ------------------------------

def reference_forward(params, x, q_cond, k_a_cond, k_b_cond,
                      *, n_heads, skip_rescale=False):
    B, C, H, W = x.shape
    CC = q_cond.shape[1]
    E = n_heads
    G = params["num_groups"]

    q_st = jnp.stack([q_cond, q_cond], axis=1).reshape(B, CC, H, W)
    k_st = jnp.stack([k_a_cond, k_b_cond], axis=1).reshape(B, CC, H, W)

    xr = x.reshape(B, G, C // G, H, W)
    mu = xr.mean(axis=(2, 3, 4), keepdims=True)
    var = ((xr - mu) ** 2).mean(axis=(2, 3, 4), keepdims=True)
    hn = ((xr - mu) / jnp.sqrt(var + 1e-6)).reshape(B, C, H, W)
    hn = hn * params["gn_gamma"][None, :, None, None] + params["gn_beta"][None, :, None, None]

    def nin_ref(t, Wm, bm):
        return jnp.einsum('bchw,cd->bdhw', t, Wm) + bm[None, :, None, None]

    q = nin_ref(jnp.concatenate([hn, q_st], 1), params["W0"], params["b0"]).reshape(B, E, C, H, W)
    k = nin_ref(jnp.concatenate([hn, k_st], 1), params["W1"], params["b1"]).reshape(B, E, C, H, W)
    v = nin_ref(jnp.concatenate([hn, k_st], 1), params["W2"], params["b2"]).reshape(B, E, C, H, W)

    q_a, q_b = q[0::2], q[1::2]
    k_a, k_b = k[0::2], k[1::2]
    v_a, v_b = v[0::2], v[1::2]

    def attend(qq, kk, vv):
        w_ = jnp.einsum('bechw,becij->behwij', qq, kk) * float(C) ** (-0.5)
        w_ = jax.nn.softmax(w_.reshape(B // 2, E, H, W, H * W), axis=-1)
        w_ = w_.reshape(B // 2, E, H, W, H, W)
        return jnp.einsum('behwij,becij->bechw', w_, vv)

    h_a = attend(q_a, k_b, v_b)
    h_b = attend(q_b, k_a, v_a)
    h = jnp.stack([h_a, h_b], axis=1).reshape(B, E * C, H, W)
    h = nin_ref(h, params["W3"], params["b3"])

    out = x + h
    if skip_rescale:
        out = out / jnp.sqrt(2.0)
    return out


# ------------------------------------ main ------------------------------------

if __name__ == "__main__":
    # small but lane-friendly shapes: n_heads*C = 128 lanes, HW = 64 tokens / element
    B, C, H, W = 4, 32, 8, 8          # B must be even (ray pairs)
    CC = 16                           # cond_chans
    E = 4                             # n_heads

    key = jax.random.PRNGKey(0)
    kx, kq, ka, kb, kp = jax.random.split(key, 5)
    x = jax.random.normal(kx, (B, C, H, W), dtype=jnp.float32)
    q_cond = jax.random.normal(kq, (B // 2, CC, H, W), dtype=jnp.float32)
    k_a_cond = jax.random.normal(ka, (B // 2, CC, H, W), dtype=jnp.float32)
    k_b_cond = jax.random.normal(kb, (B // 2, CC, H, W), dtype=jnp.float32)

    params = init_params(kp, C, CC, E)

    out = cross_attn_blockpp_forward(params, x, q_cond, k_a_cond, k_b_cond,
                                     n_heads=E, skip_rescale=False)
    out = jax.block_until_ready(out)

    ref = reference_forward(params, x, q_cond, k_a_cond, k_b_cond,
                            n_heads=E, skip_rescale=False)
    ref = jax.block_until_ready(ref)

    assert out.shape == (B, C, H, W)
    max_err = float(jnp.max(jnp.abs(out - ref)))
    # bf16 MXU inputs (f32 accumulation) vs pure-f32 reference => bf16-level tolerance
    if max_err > 5e-2:
        raise AssertionError(f"Pallas kernel mismatch vs reference, max_err={max_err}")

    print("KERNEL_OK")
</pallas_src>

<mosaic_0001>
module attributes {stable_mosaic.version = 11 : i64} {
  func.func @_gn_qkv_kernel(%arg0: i32, %arg1: memref<1x64x32xf32, #tpu.memory_space<vmem>>, %arg2: memref<1x64x16xbf16, #tpu.memory_space<vmem>>, %arg3: memref<1x64x16xbf16, #tpu.memory_space<vmem>>, %arg4: memref<1x32xf32, #tpu.memory_space<vmem>>, %arg5: memref<1x32xf32, #tpu.memory_space<vmem>>, %arg6: memref<32x8xf32, #tpu.memory_space<vmem>>, %arg7: memref<32x384xbf16, #tpu.memory_space<vmem>>, %arg8: memref<16x128xbf16, #tpu.memory_space<vmem>>, %arg9: memref<16x256xbf16, #tpu.memory_space<vmem>>, %arg10: memref<1x384xf32, #tpu.memory_space<vmem>>, %arg11: memref<1x64x128xbf16, #tpu.memory_space<vmem>>, %arg12: memref<1x64x128xbf16, #tpu.memory_space<vmem>>, %arg13: memref<1x64x128xbf16, #tpu.memory_space<vmem>>) attributes {dimension_semantics = [#tpu.dimension_semantics<parallel>], iteration_bounds = array<i64: 4>, scalar_prefetch = 0 : i64, scratch_operands = 0 : i64, tpu.core_type = #tpu.core_type<tc>, window_params = [{transform_indices = @transform_0, window_bounds = array<i64: 1, 64, 32>}, {transform_indices = @transform_1, window_bounds = array<i64: 1, 64, 16>}, {transform_indices = @transform_2, window_bounds = array<i64: 1, 64, 16>}, {pipeline_mode = #tpu.pipeline_mode<synchronous>, transform_indices = @transform_3, window_bounds = array<i64: 1, 32>}, {pipeline_mode = #tpu.pipeline_mode<synchronous>, transform_indices = @transform_4, window_bounds = array<i64: 1, 32>}, {pipeline_mode = #tpu.pipeline_mode<synchronous>, transform_indices = @transform_5, window_bounds = array<i64: 32, 8>}, {pipeline_mode = #tpu.pipeline_mode<synchronous>, transform_indices = @transform_6, window_bounds = array<i64: 32, 384>}, {pipeline_mode = #tpu.pipeline_mode<synchronous>, transform_indices = @transform_7, window_bounds = array<i64: 16, 128>}, {pipeline_mode = #tpu.pipeline_mode<synchronous>, transform_indices = @transform_8, window_bounds = array<i64: 16, 256>}, {pipeline_mode = #tpu.pipeline_mode<synchronous>, transform_indices = @transform_9, window_bounds = array<i64: 1, 384>}, {transform_indices = @transform_10, window_bounds = array<i64: 1, 64, 128>}, {transform_indices = @transform_11, window_bounds = array<i64: 1, 64, 128>}, {transform_indices = @transform_12, window_bounds = array<i64: 1, 64, 128>}]} {
    %c0 = arith.constant 0 : index
    %c0_0 = arith.constant 0 : index
    %c0_1 = arith.constant 0 : index
    %0 = vector.load %arg1[%c0, %c0_0, %c0_1] : memref<1x64x32xf32, #tpu.memory_space<vmem>>, vector<1x64x32xf32>
    %1 = vector.shape_cast %0 : vector<1x64x32xf32> to vector<64x32xf32>
    %cst = arith.constant dense<0.000000e+00> : vector<32xf32>
    %2 = vector.multi_reduction <add>, %1, %cst [0] : vector<64x32xf32> to vector<32xf32>
    %3 = vector.shape_cast %2 : vector<32xf32> to vector<1x32xf32>
    %4 = arith.mulf %1, %1 : vector<64x32xf32>
    %cst_2 = arith.constant dense<0.000000e+00> : vector<32xf32>
    %5 = vector.multi_reduction <add>, %4, %cst_2 [0] : vector<64x32xf32> to vector<32xf32>
    %6 = vector.shape_cast %5 : vector<32xf32> to vector<1x32xf32>
    %c0_3 = arith.constant 0 : index
    %c0_4 = arith.constant 0 : index
    %7 = vector.load %arg6[%c0_3, %c0_4] : memref<32x8xf32, #tpu.memory_space<vmem>>, vector<32x8xf32>
    %cst_5 = arith.constant dense<0.000000e+00> : vector<1x8xf32>
    %8 = tpu.matmul %3, %7, %cst_5 {dimension_numbers = #tpu.dot_dimension_numbers<[1], [0], [0], [1], [0, 0, 1, 1], [], []>} : vector<1x32xf32>, vector<32x8xf32>, vector<1x8xf32> -> vector<1x8xf32>
    %cst_6 = arith.constant 3.906250e-03 : f32
    %9 = vector.broadcast %cst_6 : f32 to vector<1x8xf32>
    %10 = arith.mulf %8, %9 : vector<1x8xf32>
    %cst_7 = arith.constant dense<0.000000e+00> : vector<1x8xf32>
    %11 = tpu.matmul %6, %7, %cst_7 {dimension_numbers = #tpu.dot_dimension_numbers<[1], [0], [0], [1], [0, 0, 1, 1], [], []>} : vector<1x32xf32>, vector<32x8xf32>, vector<1x8xf32> -> vector<1x8xf32>
    %cst_8 = arith.constant 3.906250e-03 : f32
    %12 = vector.broadcast %cst_8 : f32 to vector<1x8xf32>
    %13 = arith.mulf %11, %12 : vector<1x8xf32>
    %14 = arith.mulf %10, %10 : vector<1x8xf32>
    %15 = arith.subf %13, %14 : vector<1x8xf32>
    %cst_9 = arith.constant 9.99999997E-7 : f32
    %16 = vector.broadcast %cst_9 : f32 to vector<1x8xf32>
    %17 = arith.addf %15, %16 : vector<1x8xf32>
    %18 = math.rsqrt %17 : vector<1x8xf32>
    %cst_10 = arith.constant dense<0.000000e+00> : vector<1x32xf32>
    %19 = tpu.matmul %10, %7, %cst_10 {dimension_numbers = #tpu.dot_dimension_numbers<[1], [1], [0], [0], [0, 0, 1, 0], [], []>} : vector<1x8xf32>, vector<32x8xf32>, vector<1x32xf32> -> vector<1x32xf32>
    %cst_11 = arith.constant dense<0.000000e+00> : vector<1x32xf32>
    %20 = tpu.matmul %18, %7, %cst_11 {dimension_numbers = #tpu.dot_dimension_numbers<[1], [1], [0], [0], [0, 0, 1, 0], [], []>} : vector<1x8xf32>, vector<32x8xf32>, vector<1x32xf32> -> vector<1x32xf32>
    %c0_12 = arith.constant 0 : index
    %c0_13 = arith.constant 0 : index
    %21 = vector.load %arg4[%c0_12, %c0_13] : memref<1x32xf32, #tpu.memory_space<vmem>>, vector<1x32xf32>
    %22 = arith.mulf %21, %20 : vector<1x32xf32>
    %c0_14 = arith.constant 0 : index
    %c0_15 = arith.constant 0 : index
    %23 = vector.load %arg5[%c0_14, %c0_15] : memref<1x32xf32, #tpu.memory_space<vmem>>, vector<1x32xf32>
    %24 = arith.mulf %19, %22 : vector<1x32xf32>
    %25 = arith.subf %23, %24 : vector<1x32xf32>
    %26 = vector.broadcast %22 : vector<1x32xf32> to vector<64x32xf32>
    %27 = arith.mulf %1, %26 : vector<64x32xf32>
    %28 = vector.broadcast %25 : vector<1x32xf32> to vector<64x32xf32>
    %29 = arith.addf %27, %28 : vector<64x32xf32>
    %30 = arith.truncf %29 : vector<64x32xf32> to vector<64x32xbf16>
    %c0_16 = arith.constant 0 : index
    %c0_17 = arith.constant 0 : index
    %31 = vector.load %arg7[%c0_16, %c0_17] : memref<32x384xbf16, #tpu.memory_space<vmem>>, vector<32x384xbf16>
    %cst_18 = arith.constant dense<0.000000e+00> : vector<64x384xf32>
    %32 = tpu.matmul %30, %31, %cst_18 {dimension_numbers = #tpu.dot_dimension_numbers<[1], [0], [0], [1], [0, 0, 1, 1], [], []>} : vector<64x32xbf16>, vector<32x384xbf16>, vector<64x384xf32> -> vector<64x384xf32>
    %c0_19 = arith.constant 0 : index
    %c0_20 = arith.constant 0 : index
    %c0_21 = arith.constant 0 : index
    %33 = vector.load %arg2[%c0_19, %c0_20, %c0_21] : memref<1x64x16xbf16, #tpu.memory_space<vmem>>, vector<1x64x16xbf16>
    %34 = vector.shape_cast %33 : vector<1x64x16xbf16> to vector<64x16xbf16>
    %c0_22 = arith.constant 0 : index
    %c0_23 = arith.constant 0 : index
    %35 = vector.load %arg8[%c0_22, %c0_23] : memref<16x128xbf16, #tpu.memory_space<vmem>>, vector<16x128xbf16>
    %cst_24 = arith.constant dense<0.000000e+00> : vector<64x128xf32>
    %36 = tpu.matmul %34, %35, %cst_24 {dimension_numbers = #tpu.dot_dimension_numbers<[1], [0], [0], [1], [0, 0, 1, 1], [], []>} : vector<64x16xbf16>, vector<16x128xbf16>, vector<64x128xf32> -> vector<64x128xf32>
    %c0_25 = arith.constant 0 : index
    %c0_26 = arith.constant 0 : index
    %c0_27 = arith.constant 0 : index
    %37 = vector.load %arg3[%c0_25, %c0_26, %c0_27] : memref<1x64x16xbf16, #tpu.memory_space<vmem>>, vector<1x64x16xbf16>
    %38 = vector.shape_cast %37 : vector<1x64x16xbf16> to vector<64x16xbf16>
    %c0_28 = arith.constant 0 : index
    %c0_29 = arith.constant 0 : index
    %39 = vector.load %arg9[%c0_28, %c0_29] : memref<16x256xbf16, #tpu.memory_space<vmem>>, vector<16x256xbf16>
    %cst_30 = arith.constant dense<0.000000e+00> : vector<64x256xf32>
    %40 = tpu.matmul %38, %39, %cst_30 {dimension_numbers = #tpu.dot_dimension_numbers<[1], [0], [0], [1], [0, 0, 1, 1], [], []>} : vector<64x16xbf16>, vector<16x256xbf16>, vector<64x256xf32> -> vector<64x256xf32>
    %41 = tpu.concatenate %36, %40 in 1 : vector<64x128xf32>, vector<64x256xf32> -> vector<64x384xf32>
    %42 = arith.addf %32, %41 : vector<64x384xf32>
    %c0_31 = arith.constant 0 : index
    %c0_32 = arith.constant 0 : index
    %43 = vector.load %arg10[%c0_31, %c0_32] : memref<1x384xf32, #tpu.memory_space<vmem>>, vector<1x384xf32>
    %44 = vector.broadcast %43 : vector<1x384xf32> to vector<64x384xf32>
    %45 = arith.addf %42, %44 : vector<64x384xf32>
    %46 = vector.extract_strided_slice %45 {offsets = [0, 0], sizes = [64, 128], strides = [1, 1]} : vector<64x384xf32> to vector<64x128xf32>
    %47 = arith.truncf %46 : vector<64x128xf32> to vector<64x128xbf16>
    %c0_33 = arith.constant 0 : index
    %c0_34 = arith.constant 0 : index
    %c0_35 = arith.constant 0 : index
    %48 = vector.load %arg11[%c0_33, %c0_34, %c0_35] : memref<1x64x128xbf16, #tpu.memory_space<vmem>>, vector<1x64x128xbf16>
    %49 = vector.shape_cast %48 : vector<1x64x128xbf16> to vector<64x128xbf16>
    %50 = vector.shape_cast %47 : vector<64x128xbf16> to vector<1x64x128xbf16>
    tpu.vector_store %arg11[%c0_33, %c0_34, %c0_35], %50 {strides = array<i32>} : memref<1x64x128xbf16, #tpu.memory_space<vmem>>, vector<1x64x128xbf16>,
    %51 = vector.extract_strided_slice %45 {offsets = [0, 128], sizes = [64, 128], strides = [1, 1]} : vector<64x384xf32> to vector<64x128xf32>
    %52 = arith.truncf %51 : vector<64x128xf32> to vector<64x128xbf16>
    %c0_36 = arith.constant 0 : index
    %c0_37 = arith.constant 0 : index
    %c0_38 = arith.constant 0 : index
    %53 = vector.load %arg12[%c0_36, %c0_37, %c0_38] : memref<1x64x128xbf16, #tpu.memory_space<vmem>>, vector<1x64x128xbf16>
    %54 = vector.shape_cast %53 : vector<1x64x128xbf16> to vector<64x128xbf16>
    %55 = vector.shape_cast %52 : vector<64x128xbf16> to vector<1x64x128xbf16>
    tpu.vector_store %arg12[%c0_36, %c0_37, %c0_38], %55 {strides = array<i32>} : memref<1x64x128xbf16, #tpu.memory_space<vmem>>, vector<1x64x128xbf16>,
    %56 = vector.extract_strided_slice %45 {offsets = [0, 256], sizes = [64, 128], strides = [1, 1]} : vector<64x384xf32> to vector<64x128xf32>
    %57 = arith.truncf %56 : vector<64x128xf32> to vector<64x128xbf16>
    %c0_39 = arith.constant 0 : index
    %c0_40 = arith.constant 0 : index
    %c0_41 = arith.constant 0 : index
    %58 = vector.load %arg13[%c0_39, %c0_40, %c0_41] : memref<1x64x128xbf16, #tpu.memory_space<vmem>>, vector<1x64x128xbf16>
    %59 = vector.shape_cast %58 : vector<1x64x128xbf16> to vector<64x128xbf16>
    %60 = vector.shape_cast %57 : vector<64x128xbf16> to vector<1x64x128xbf16>
    tpu.vector_store %arg13[%c0_39, %c0_40, %c0_41], %60 {strides = array<i32>} : memref<1x64x128xbf16, #tpu.memory_space<vmem>>, vector<1x64x128xbf16>,
    return
  }
  func.func @transform_0(%arg0: i32) -> (i32, i32, i32) {
    %c0_i32 = arith.constant 0 : i32
    %c0_i32_0 = arith.constant 0 : i32
    %c0_i32_1 = arith.constant 0 : i32
    return %arg0, %c0_i32, %c0_i32_0 : i32, i32, i32
  }
  func.func @transform_1(%arg0: i32) -> (i32, i32, i32) {
    %c0_i32 = arith.constant 0 : i32
    %c0_i32_0 = arith.constant 0 : i32
    %c0_i32_1 = arith.constant 0 : i32
    return %arg0, %c0_i32, %c0_i32_0 : i32, i32, i32
  }
  func.func @transform_2(%arg0: i32) -> (i32, i32, i32) {
    %c0_i32 = arith.constant 0 : i32
    %c0_i32_0 = arith.constant 0 : i32
    %c0_i32_1 = arith.constant 0 : i32
    return %arg0, %c0_i32, %c0_i32_0 : i32, i32, i32
  }
  func.func @transform_3(%arg0: i32) -> (i32, i32) {
    %c0_i32 = arith.constant 0 : i32
    %c0_i32_0 = arith.constant 0 : i32
    %c0_i32_1 = arith.constant 0 : i32
    return %c0_i32, %c0_i32_0 : i32, i32
  }
  func.func @transform_4(%arg0: i32) -> (i32, i32) {
    %c0_i32 = arith.constant 0 : i32
    %c0_i32_0 = arith.constant 0 : i32
    %c0_i32_1 = arith.constant 0 : i32
    return %c0_i32, %c0_i32_0 : i32, i32
  }
  func.func @transform_5(%arg0: i32) -> (i32, i32) {
    %c0_i32 = arith.constant 0 : i32
    %c0_i32_0 = arith.constant 0 : i32
    %c0_i32_1 = arith.constant 0 : i32
    return %c0_i32, %c0_i32_0 : i32, i32
  }
  func.func @transform_6(%arg0: i32) -> (i32, i32) {
    %c0_i32 = arith.constant 0 : i32
    %c0_i32_0 = arith.constant 0 : i32
    %c0_i32_1 = arith.constant 0 : i32
    return %c0_i32, %c0_i32_0 : i32, i32
  }
  func.func @transform_7(%arg0: i32) -> (i32, i32) {
    %c0_i32 = arith.constant 0 : i32
    %c0_i32_0 = arith.constant 0 : i32
    %c0_i32_1 = arith.constant 0 : i32
    return %c0_i32, %c0_i32_0 : i32, i32
  }
  func.func @transform_8(%arg0: i32) -> (i32, i32) {
    %c0_i32 = arith.constant 0 : i32
    %c0_i32_0 = arith.constant 0 : i32
    %c0_i32_1 = arith.constant 0 : i32
    return %c0_i32, %c0_i32_0 : i32, i32
  }
  func.func @transform_9(%arg0: i32) -> (i32, i32) {
    %c0_i32 = arith.constant 0 : i32
    %c0_i32_0 = arith.constant 0 : i32
    %c0_i32_1 = arith.constant 0 : i32
    return %c0_i32, %c0_i32_0 : i32, i32
  }
  func.func @transform_10(%arg0: i32) -> (i32, i32, i32) {
    %c0_i32 = arith.constant 0 : i32
    %c0_i32_0 = arith.constant 0 : i32
    %c0_i32_1 = arith.constant 0 : i32
    return %arg0, %c0_i32, %c0_i32_0 : i32, i32, i32
  }
  func.func @transform_11(%arg0: i32) -> (i32, i32, i32) {
    %c0_i32 = arith.constant 0 : i32
    %c0_i32_0 = arith.constant 0 : i32
    %c0_i32_1 = arith.constant 0 : i32
    return %arg0, %c0_i32, %c0_i32_0 : i32, i32, i32
  }
  func.func @transform_12(%arg0: i32) -> (i32, i32, i32) {
    %c0_i32 = arith.constant 0 : i32
    %c0_i32_0 = arith.constant 0 : i32
    %c0_i32_1 = arith.constant 0 : i32
    return %arg0, %c0_i32, %c0_i32_0 : i32, i32, i32
  }
}

</mosaic_0001>

<llo_original>
// kernel: tpu_custom_call.1
$region0: #{tpu_custom_call.1}
  #allocation0 [shape = 'u32[]', space=smem, size = 0x4, offset = 0x4, fixed_abs, tag = 'smem constant byte address 0x4 - core index']
  #allocation1 [shape = 'u32[144,128]{1,0:T(1,128)}', space=vmem, size = 0x12000, scoped, tag = 'internal scratch']
  %s0 = inlined_call_operand.vmem [shape: f32[4,64,32], index: 0, kind: input, shape index: {}]
  %s1 = inlined_call_operand.vmem [shape: bf16[4,64,16], index: 1, kind: input, shape index: {}]
  %s2 = inlined_call_operand.vmem [shape: bf16[4,64,16], index: 2, kind: input, shape index: {}]
  %s3 = inlined_call_operand.vmem [shape: f32[1,32], index: 3, kind: input, shape index: {}]
  %s4 = inlined_call_operand.vmem [shape: f32[1,32], index: 4, kind: input, shape index: {}]
  %s5 = inlined_call_operand.vmem [shape: f32[32,8], index: 5, kind: input, shape index: {}]
  %s6 = inlined_call_operand.vmem [shape: bf16[32,384], index: 6, kind: input, shape index: {}]
  %s7 = inlined_call_operand.vmem [shape: bf16[16,128], index: 7, kind: input, shape index: {}]
  %s8 = inlined_call_operand.vmem [shape: bf16[16,256], index: 8, kind: input, shape index: {}]
  %s9 = inlined_call_operand.vmem [shape: f32[1,384], index: 9, kind: input, shape index: {}]
  %s10 = inlined_call_operand.hbm [shape: bf16[4,64,128], index: 10, kind: output, shape index: {0}]
  %s11 = inlined_call_operand.hbm [shape: bf16[4,64,128], index: 11, kind: output, shape index: {1}]
  %s12 = inlined_call_operand.hbm [shape: bf16[4,64,128], index: 12, kind: output, shape index: {2}]
  %13 = xla_tuple %s10, %s11, %s12
  %s14 = sld [smem:[#allocation0]]
  $region89: #{tpu_custom_call.1} parent=0
    _
  %s16 = ssub.s32 1, %s14
  %s17 = scalar_select 0, %s16, %s14
  $region1: #{tpu_custom_call.1} parent=0
    #allocation2 [shape = 'u8[32768]{0}', space=vmem, size = 0x8000, scoped, tag = 'output window, operand 0']
    #allocation3 [shape = 's32[2]{0}', space=sflag, size = 0x8, scoped, tag = 'scoped memory for tpu_custom_call.1']
    #allocation4 [shape = 'u8[32768]{0}', space=vmem, size = 0x8000, scoped, tag = 'output window, operand 1']
    #allocation5 [shape = 's32[2]{0}', space=sflag, size = 0x8, scoped, tag = 'scoped memory for tpu_custom_call.1']
    #allocation6 [shape = 'u8[32768]{0}', space=vmem, size = 0x8000, scoped, tag = 'output window, operand 2']
    %18 = vsyncpa [#allocation3], 0
    %s19 = scalar_lea.sflag [#allocation3], 1
    %20 = vsyncpa %s19, 0
    %21 = vsyncpa [#allocation5], 0
    %s22 = scalar_lea.sflag [#allocation5], 1
    %23 = vsyncpa %s22, 0
    loop: start=0, step=1, limit=6
    $region2: #{tpu_custom_call.1} parent=1 // loop_pre_header
      _
    $region3: #{tpu_custom_call.1} parent=1 // loop_header
      %s25 = sphi 0, %s29
      %p26 = scmp.ge.s32.totalorder %s25, 6
      %s35 = sphi 0, %s37
      %s38 = sphi 0, %s35
      %s39 = sphi 0, %s38
      %s55 = sphi 0, %s39
      %s61 = sphi 0, %s63
      %s64 = sphi 0, %s61
      %s65 = sphi 0, %s64
      %s81 = sphi 0, %s65
      %s87 = sphi 0, %s89
      %s90 = sphi 0, %s87
      %s91 = sphi 0, %s90
      %s107 = sphi 0, %s91
      %s111 = sphi 0, %s111
      %s113 = sphi 0, %s111
      %s114 = sphi 0, %s113
      %s128 = sphi 0, %s114
      %s132 = sphi 0, %s132
      %s134 = sphi 0, %s132
      %s135 = sphi 0, %s134
      %s149 = sphi 0, %s135
      %s153 = sphi 0, %s153
      %s155 = sphi 0, %s153
      %s156 = sphi 0, %s155
      %s170 = sphi 0, %s156
      %s174 = sphi 0, %s174
      %s176 = sphi 0, %s174
      %s177 = sphi 0, %s176
      %s191 = sphi 0, %s177
      %s195 = sphi 0, %s195
      %s197 = sphi 0, %s195
      %s198 = sphi 0, %s197
      %s212 = sphi 0, %s198
      %s216 = sphi 0, %s216
      %s218 = sphi 0, %s216
      %s219 = sphi 0, %s218
      %s233 = sphi 0, %s219
      %s237 = sphi 0, %s237
      %s239 = sphi 0, %s237
      %s240 = sphi 0, %s239
      %s254 = sphi 0, %s240
      %s260 = sphi 0, %s262
      %s263 = sphi 0, %s260
      %s264 = sphi 0, %s263
      %s280 = sphi 0, %s264
      %s286 = sphi 0, %s288
      %s289 = sphi 0, %s286
      %s290 = sphi 0, %s289
      %s306 = sphi 0, %s290
      %s312 = sphi 0, %s314
      %s315 = sphi 0, %s312
      %s316 = sphi 0, %s315
      %s332 = sphi 0, %s316
    $region4: #{tpu_custom_call.1} parent=1 // loop_header_branch
      %28 = sbr.rel (%p26) target = $region8
    $region5: #{tpu_custom_call.1} parent=1 // loop_body
      %s30 = ssub.s32 %s25, 1
      %s31 = ssub.s32 %s25, 2
      %s32 = sadd.s32 %s25, 1
      %s33 = ssub.s32 %s25, %s32
      %p34 = scmp.eq.s32.totalorder %s33, 0
      %s36 = sadd.s32 %s35, 1
      %s37 = scalar_select %p34, %s35, %s36
      %p40 = pneg %p34
      %p41 = scmp.eq.s32.totalorder %s25, 3
      %p42 = por %p40, %p41
      %p43 = scmp.ne.s32.totalorder %s35, %s38
      %p44 = scmp.eq.s32.totalorder %s25, 0
      %p45 = por %p43, %p44
      %p46 = scmp.ne.s32.totalorder %s35, %s38
      %p47 = scmp.eq.s32.totalorder %s30, 3
      %p48 = por %p46, %p47
      %p49 = scmp.ne.s32.totalorder %s38, %s39
      %p50 = scmp.eq.s32.totalorder %s30, 0
      %p51 = por %p49, %p50
      %p52 = scmp.ne.s32.totalorder %s38, %s39
      %p53 = scmp.eq.s32.totalorder %s31, 3
      %p54 = por %p52, %p53
      %p56 = scmp.ne.s32.totalorder %s39, %s55
      %p57 = scmp.eq.s32.totalorder %s31, 0
      %p58 = por %p56, %p57
      %s59 = ssub.s32 %s25, %s32
      %p60 = scmp.eq.s32.totalorder %s59, 0
      %s62 = sadd.s32 %s61, 1
      %s63 = scalar_select %p60, %s61, %s62
      %p66 = pneg %p60
      %p67 = scmp.eq.s32.totalorder %s25, 3
      %p68 = por %p66, %p67
      %p69 = scmp.ne.s32.totalorder %s61, %s64
      %p70 = scmp.eq.s32.totalorder %s25, 0
      %p71 = por %p69, %p70
      %p72 = scmp.ne.s32.totalorder %s61, %s64
      %p73 = scmp.eq.s32.totalorder %s30, 3
      %p74 = por %p72, %p73
      %p75 = scmp.ne.s32.totalorder %s64, %s65
      %p76 = scmp.eq.s32.totalorder %s30, 0
      %p77 = por %p75, %p76
      %p78 = scmp.ne.s32.totalorder %s64, %s65
      %p79 = scmp.eq.s32.totalorder %s31, 3
      %p80 = por %p78, %p79
      %p82 = scmp.ne.s32.totalorder %s65, %s81
      %p83 = scmp.eq.s32.totalorder %s31, 0
      %p84 = por %p82, %p83
      %s85 = ssub.s32 %s25, %s32
      %p86 = scmp.eq.s32.totalorder %s85, 0
      %s88 = sadd.s32 %s87, 1
      %s89 = scalar_select %p86, %s87, %s88
      %p92 = pneg %p86
      %p93 = scmp.eq.s32.totalorder %s25, 3
      %p94 = por %p92, %p93
      %p95 = scmp.ne.s32.totalorder %s87, %s90
      %p96 = scmp.eq.s32.totalorder %s25, 0
      %p97 = por %p95, %p96
      %p98 = scmp.ne.s32.totalorder %s87, %s90
      %p99 = scmp.eq.s32.totalorder %s30, 3
      %p100 = por %p98, %p99
      %p101 = scmp.ne.s32.totalorder %s90, %s91
      %p102 = scmp.eq.s32.totalorder %s30, 0
      %p103 = por %p101, %p102
      %p104 = scmp.ne.s32.totalorder %s90, %s91
      %p105 = scmp.eq.s32.totalorder %s31, 3
      %p106 = por %p104, %p105
      %p108 = scmp.ne.s32.totalorder %s91, %s107
      %p109 = scmp.eq.s32.totalorder %s31, 0
      %p110 = por %p108, %p109
      %s112 = sadd.s32 %s111, 1
      %p115 = scmp.eq.s32.totalorder %s25, 3
      %p116 = scmp.ne.s32.totalorder %s111, %s113
      %p117 = scmp.eq.s32.totalorder %s25, 0
      %p118 = por %p116, %p117
      %p119 = scmp.ne.s32.totalorder %s111, %s113
      %p120 = scmp.eq.s32.totalorder %s30, 3
      %p121 = por %p119, %p120
      %p122 = scmp.ne.s32.totalorder %s113, %s114
      %p123 = scmp.eq.s32.totalorder %s30, 0
      %p124 = por %p122, %p123
      %p125 = scmp.ne.s32.totalorder %s113, %s114
      %p126 = scmp.eq.s32.totalorder %s31, 3
      %p127 = por %p125, %p126
      %p129 = scmp.ne.s32.totalorder %s114, %s128
      %p130 = scmp.eq.s32.totalorder %s31, 0
      %p131 = por %p129, %p130
      %s133 = sadd.s32 %s132, 1
      %p136 = scmp.eq.s32.totalorder %s25, 3
      %p137 = scmp.ne.s32.totalorder %s132, %s134
      %p138 = scmp.eq.s32.totalorder %s25, 0
      %p139 = por %p137, %p138
      %p140 = scmp.ne.s32.totalorder %s132, %s134
      %p141 = scmp.eq.s32.totalorder %s30, 3
      %p142 = por %p140, %p141
      %p143 = scmp.ne.s32.totalorder %s134, %s135
      %p144 = scmp.eq.s32.totalorder %s30, 0
      %p145 = por %p143, %p144
      %p146 = scmp.ne.s32.totalorder %s134, %s135
      %p147 = scmp.eq.s32.totalorder %s31, 3
      %p148 = por %p146, %p147
      %p150 = scmp.ne.s32.totalorder %s135, %s149
      %p151 = scmp.eq.s32.totalorder %s31, 0
      %p152 = por %p150, %p151
      %s154 = sadd.s32 %s153, 1
      %p157 = scmp.eq.s32.totalorder %s25, 3
      %p158 = scmp.ne.s32.totalorder %s153, %s155
      %p159 = scmp.eq.s32.totalorder %s25, 0
      %p160 = por %p158, %p159
      %p161 = scmp.ne.s32.totalorder %s153, %s155
      %p162 = scmp.eq.s32.totalorder %s30, 3
      %p163 = por %p161, %p162
      %p164 = scmp.ne.s32.totalorder %s155, %s156
      %p165 = scmp.eq.s32.totalorder %s30, 0
      %p166 = por %p164, %p165
      %p167 = scmp.ne.s32.totalorder %s155, %s156
      %p168 = scmp.eq.s32.totalorder %s31, 3
      %p169 = por %p167, %p168
      %p171 = scmp.ne.s32.totalorder %s156, %s170
      %p172 = scmp.eq.s32.totalorder %s31, 0
      %p173 = por %p171, %p172
      %s175 = sadd.s32 %s174, 1
      %p178 = scmp.eq.s32.totalorder %s25, 3
      %p179 = scmp.ne.s32.totalorder %s174, %s176
      %p180 = scmp.eq.s32.totalorder %s25, 0
      %p181 = por %p179, %p180
      %p182 = scmp.ne.s32.totalorder %s174, %s176
      %p183 = scmp.eq.s32.totalorder %s30, 3
      %p184 = por %p182, %p183
      %p185 = scmp.ne.s32.totalorder %s176, %s177
      %p186 = scmp.eq.s32.totalorder %s30, 0
      %p187 = por %p185, %p186
      %p188 = scmp.ne.s32.totalorder %s176, %s177
      %p189 = scmp.eq.s32.totalorder %s31, 3
      %p190 = por %p188, %p189
      %p192 = scmp.ne.s32.totalorder %s177, %s191
      %p193 = scmp.eq.s32.totalorder %s31, 0
      %p194 = por %p192, %p193
      %s196 = sadd.s32 %s195, 1
      %p199 = scmp.eq.s32.totalorder %s25, 3
      %p200 = scmp.ne.s32.totalorder %s195, %s197
      %p201 = scmp.eq.s32.totalorder %s25, 0
      %p202 = por %p200, %p201
      %p203 = scmp.ne.s32.totalorder %s195, %s197
      %p204 = scmp.eq.s32.totalorder %s30, 3
      %p205 = por %p203, %p204
      %p206 = scmp.ne.s32.totalorder %s197, %s198
      %p207 = scmp.eq.s32.totalorder %s30, 0
      %p208 = por %p206, %p207
      %p209 = scmp.ne.s32.totalorder %s197, %s198
      %p210 = scmp.eq.s32.totalorder %s31, 3
      %p211 = por %p209, %p210
      %p213 = scmp.ne.s32.totalorder %s198, %s212
      %p214 = scmp.eq.s32.totalorder %s31, 0
      %p215 = por %p213, %p214
      %s217 = sadd.s32 %s216, 1
      %p220 = scmp.eq.s32.totalorder %s25, 3
      %p221 = scmp.ne.s32.totalorder %s216, %s218
      %p222 = scmp.eq.s32.totalorder %s25, 0
      %p223 = por %p221, %p222
      %p224 = scmp.ne.s32.totalorder %s216, %s218
      %p225 = scmp.eq.s32.totalorder %s30, 3
      %p226 = por %p224, %p225
      %p227 = scmp.ne.s32.totalorder %s218, %s219
      %p228 = scmp.eq.s32.totalorder %s30, 0
      %p229 = por %p227, %p228
      %p230 = scmp.ne.s32.totalorder %s218, %s219
      %p231 = scmp.eq.s32.totalorder %s31, 3
      %p232 = por %p230, %p231
      %p234 = scmp.ne.s32.totalorder %s219, %s233
      %p235 = scmp.eq.s32.totalorder %s31, 0
      %p236 = por %p234, %p235
      %s238 = sadd.s32 %s237, 1
      %p241 = scmp.eq.s32.totalorder %s25, 3
      %p242 = scmp.ne.s32.totalorder %s237, %s239
      %p243 = scmp.eq.s32.totalorder %s25, 0
      %p244 = por %p242, %p243
      %p245 = scmp.ne.s32.totalorder %s237, %s239
      %p246 = scmp.eq.s32.totalorder %s30, 3
      %p247 = por %p245, %p246
      %p248 = scmp.ne.s32.totalorder %s239, %s240
      %p249 = scmp.eq.s32.totalorder %s30, 0
      %p250 = por %p248, %p249
      %p251 = scmp.ne.s32.totalorder %s239, %s240
      %p252 = scmp.eq.s32.totalorder %s31, 3
      %p253 = por %p251, %p252
      %p255 = scmp.ne.s32.totalorder %s240, %s254
      %p256 = scmp.eq.s32.totalorder %s31, 0
      %p257 = por %p255, %p256
      %s258 = ssub.s32 %s25, %s32
      %p259 = scmp.eq.s32.totalorder %s258, 0
      %s261 = sadd.s32 %s260, 1
      %s262 = scalar_select %p259, %s260, %s261
      %p265 = pneg %p259
      %p266 = scmp.eq.s32.totalorder %s25, 3
      %p267 = por %p265, %p266
      %p268 = scmp.ne.s32.totalorder %s260, %s263
      %p269 = scmp.eq.s32.totalorder %s25, 0
      %p270 = por %p268, %p269
      %p271 = scmp.ne.s32.totalorder %s260, %s263
      %p272 = scmp.eq.s32.totalorder %s30, 3
      %p273 = por %p271, %p272
      %p274 = scmp.ne.s32.totalorder %s263, %s264
      %p275 = scmp.eq.s32.totalorder %s30, 0
      %p276 = por %p274, %p275
      %p277 = scmp.ne.s32.totalorder %s263, %s264
      %p278 = scmp.eq.s32.totalorder %s31, 3
      %p279 = por %p277, %p278
      %p281 = scmp.ne.s32.totalorder %s264, %s280
      %p282 = scmp.eq.s32.totalorder %s31, 0
      %p283 = por %p281, %p282
      %s284 = ssub.s32 %s25, %s32
      %p285 = scmp.eq.s32.totalorder %s284, 0
      %s287 = sadd.s32 %s286, 1
      %s288 = scalar_select %p285, %s286, %s287
      %p291 = pneg %p285
      %p292 = scmp.eq.s32.totalorder %s25, 3
      %p293 = por %p291, %p292
      %p294 = scmp.ne.s32.totalorder %s286, %s289
      %p295 = scmp.eq.s32.totalorder %s25, 0
      %p296 = por %p294, %p295
      %p297 = scmp.ne.s32.totalorder %s286, %s289
      %p298 = scmp.eq.s32.totalorder %s30, 3
      %p299 = por %p297, %p298
      %p300 = scmp.ne.s32.totalorder %s289, %s290
      %p301 = scmp.eq.s32.totalorder %s30, 0
      %p302 = por %p300, %p301
      %p303 = scmp.ne.s32.totalorder %s289, %s290
      %p304 = scmp.eq.s32.totalorder %s31, 3
      %p305 = por %p303, %p304
      %p307 = scmp.ne.s32.totalorder %s290, %s306
      %p308 = scmp.eq.s32.totalorder %s31, 0
      %p309 = por %p307, %p308
      %s310 = ssub.s32 %s25, %s32
      %p311 = scmp.eq.s32.totalorder %s310, 0
      %s313 = sadd.s32 %s312, 1
      %s314 = scalar_select %p311, %s312, %s313
      %p317 = pneg %p311
      %p318 = scmp.eq.s32.totalorder %s25, 3
      %p319 = por %p317, %p318
      %p320 = scmp.ne.s32.totalorder %s312, %s315
      %p321 = scmp.eq.s32.totalorder %s25, 0
      %p322 = por %p320, %p321
      %p323 = scmp.ne.s32.totalorder %s312, %s315
      %p324 = scmp.eq.s32.totalorder %s30, 3
      %p325 = por %p323, %p324
      %p326 = scmp.ne.s32.totalorder %s315, %s316
      %p327 = scmp.eq.s32.totalorder %s30, 0
      %p328 = por %p326, %p327
      %p329 = scmp.ne.s32.totalorder %s315, %s316
      %p330 = scmp.eq.s32.totalorder %s31, 3
      %p331 = por %p329, %p330
      %p333 = scmp.ne.s32.totalorder %s316, %s332
      %p334 = scmp.eq.s32.totalorder %s31, 0
      %p335 = por %p333, %p334
      %p336 = scmp.le.s32.totalorder 1, %s25
      %p337 = scmp.lt.s32.totalorder %s25, 5
      %p338 = pnand %p336, %p337
      %p339 = pneg %p338
      // Predicated region
      $region9: #{tpu_custom_call.1} parent=5 // pred_check
        _
      $region10: #{tpu_custom_call.1} parent=5 // pred_check_branch
        %341 = sbr.rel (%p338) target = $region12
      $region11: #{tpu_custom_call.1} parent=5 // pred_region
        %s342 = ssub.s32 %s25, 1
        // Predicated region
        $region13: #{tpu_custom_call.1} parent=11 // pred_check
          %p343 = pneg %p124
        $region14: #{tpu_custom_call.1} parent=11 // pred_check_branch
          %345 = sbr.rel (%p343) target = $region16
        $region15: #{tpu_custom_call.1} parent=11 // pred_region
          _
        $region16: #{tpu_custom_call.1} parent=11 // pred_fallthru
          _
        // Predicated region
        $region17: #{tpu_custom_call.1} parent=11 // pred_check
          %p346 = pneg %p145
        $region18: #{tpu_custom_call.1} parent=11 // pred_check_branch
          %348 = sbr.rel (%p346) target = $region20
        $region19: #{tpu_custom_call.1} parent=11 // pred_region
          _
        $region20: #{tpu_custom_call.1} parent=11 // pred_fallthru
          _
        // Predicated region
        $region21: #{tpu_custom_call.1} parent=11 // pred_check
          %p349 = pneg %p166
        $region22: #{tpu_custom_call.1} parent=11 // pred_check_branch
          %351 = sbr.rel (%p349) target = $region24
        $region23: #{tpu_custom_call.1} parent=11 // pred_region
          _
        $region24: #{tpu_custom_call.1} parent=11 // pred_fallthru
          _
        // Predicated region
        $region25: #{tpu_custom_call.1} parent=11 // pred_check
          %p352 = pneg %p187
        $region26: #{tpu_custom_call.1} parent=11 // pred_check_branch
          %354 = sbr.rel (%p352) target = $region28
        $region27: #{tpu_custom_call.1} parent=11 // pred_region
          _
        $region28: #{tpu_custom_call.1} parent=11 // pred_fallthru
          _
        // Predicated region
        $region29: #{tpu_custom_call.1} parent=11 // pred_check
          %p355 = pneg %p208
        $region30: #{tpu_custom_call.1} parent=11 // pred_check_branch
          %357 = sbr.rel (%p355) target = $region32
        $region31: #{tpu_custom_call.1} parent=11 // pred_region
          _
        $region32: #{tpu_custom_call.1} parent=11 // pred_fallthru
          _
        // Predicated region
        $region33: #{tpu_custom_call.1} parent=11 // pred_check
          %p358 = pneg %p229
        $region34: #{tpu_custom_call.1} parent=11 // pred_check_branch
          %360 = sbr.rel (%p358) target = $region36
        $region35: #{tpu_custom_call.1} parent=11 // pred_region
          _
        $region36: #{tpu_custom_call.1} parent=11 // pred_fallthru
          _
        // Predicated region
        $region37: #{tpu_custom_call.1} parent=11 // pred_check
          %p361 = pneg %p250
        $region38: #{tpu_custom_call.1} parent=11 // pred_check_branch
          %363 = sbr.rel (%p361) target = $region40
        $region39: #{tpu_custom_call.1} parent=11 // pred_region
          _
        $region40: #{tpu_custom_call.1} parent=11 // pred_fallthru
          _
      $region12: #{tpu_custom_call.1} parent=5 // pred_fallthru
        _
      %p364 = scmp.lt.s32.totalorder %s25, 4
      // Predicated region
      $region41: #{tpu_custom_call.1} parent=5 // pred_check
        %p365 = pneg %p364
      $region42: #{tpu_custom_call.1} parent=5 // pred_check_branch
        %367 = sbr.rel (%p365) target = $region44
      $region43: #{tpu_custom_call.1} parent=5 // pred_region
        // Predicated region
        $region45: #{tpu_custom_call.1} parent=43 // pred_check
          %p368 = pneg %p45
        $region46: #{tpu_custom_call.1} parent=43 // pred_check_branch
          %370 = sbr.rel (%p368) target = $region48
        $region47: #{tpu_custom_call.1} parent=43 // pred_region
          %p371 = scmp.lt.s32.totalorder %s25, 3
          %s372 = scalar_select %p371, %s25, 3
          %s373 = smul.addr %s372, 8
          %s374 = smul.addr %s373, 8
          %s375 = scalar_lea.vmem %s0, %s374
        $region48: #{tpu_custom_call.1} parent=43 // pred_fallthru
          _
        // Predicated region
        $region49: #{tpu_custom_call.1} parent=43 // pred_check
          %p376 = pneg %p71
        $region50: #{tpu_custom_call.1} parent=43 // pred_check_branch
          %378 = sbr.rel (%p376) target = $region52
        $region51: #{tpu_custom_call.1} parent=43 // pred_region
          %p379 = scmp.lt.s32.totalorder %s25, 3
          %s380 = scalar_select %p379, %s25, 3
          %s381 = smul.addr %s380, 8
          %s382 = smul.addr %s381, 4
          %s383 = scalar_lea.vmem %s1, %s382
        $region52: #{tpu_custom_call.1} parent=43 // pred_fallthru
          _
        // Predicated region
        $region53: #{tpu_custom_call.1} parent=43 // pred_check
          %p384 = pneg %p97
        $region54: #{tpu_custom_call.1} parent=43 // pred_check_branch
          %386 = sbr.rel (%p384) target = $region56
        $region55: #{tpu_custom_call.1} parent=43 // pred_region
          %p387 = scmp.lt.s32.totalorder %s25, 3
          %s388 = scalar_select %p387, %s25, 3
          %s389 = smul.addr %s388, 8
          %s390 = smul.addr %s389, 4
          %s391 = scalar_lea.vmem %s2, %s390
        $region56: #{tpu_custom_call.1} parent=43 // pred_fallthru
          _
      $region44: #{tpu_custom_call.1} parent=5 // pred_fallthru
        _
      %p392 = scmp.le.s32.totalorder 1, %s25
      %p393 = scmp.lt.s32.totalorder %s25, 5
      %p394 = pnand %p392, %p393
      %p395 = pneg %p394
      // Predicated region
      $region57: #{tpu_custom_call.1} parent=5 // pred_check
        _
      $region58: #{tpu_custom_call.1} parent=5 // pred_check_branch
        %397 = sbr.rel (%p394) target = $region60
      $region59: #{tpu_custom_call.1} parent=5 // pred_region
        %s398 = ssub.s32 %s25, 1
        %p399 = scmp.lt.s32.totalorder %s30, 3
        %s400 = scalar_select %p399, %s30, 3
        %s401 = smul.addr %s400, 8
        %s402 = smul.addr %s401, 8
        %s403 = scalar_lea.vmem %s0, %s402
        %p404 = pneg %p51
        %p405 = pneg %p48
        %p406 = scmp.lt.s32.totalorder %s30, 3
        %s407 = scalar_select %p406, %s30, 3
        %s408 = smul.addr %s407, 8
        %s409 = smul.addr %s408, 4
        %s410 = scalar_lea.vmem %s1, %s409
        %p411 = pneg %p77
        %p412 = pneg %p74
        %p413 = scmp.lt.s32.totalorder %s30, 3
        %s414 = scalar_select %p413, %s30, 3
        %s415 = smul.addr %s414, 8
        %s416 = smul.addr %s415, 4
        %s417 = scalar_lea.vmem %s2, %s416
        %p418 = pneg %p103
        %p419 = pneg %p100
        %p420 = pneg %p124
        %p421 = pneg %p121
        %p422 = pneg %p145
        %p423 = pneg %p142
        %p424 = pneg %p166
        %p425 = pneg %p163
        %p426 = pneg %p187
        %p427 = pneg %p184
        %p428 = pneg %p208
        %p429 = pneg %p205
        %p430 = pneg %p229
        %p431 = pneg %p226
        %p432 = pneg %p250
        %p433 = pneg %p247
        %p434 = pneg %p276
        %p435 = pneg %p273
        %s436 = sand.u32 %s263, 1
        %s437 = scalar_lea.sflag [#allocation3], %s436
        %s438 = sand.u32 %s263, 1
        %s439 = smul.addr %s438, 32
        %s440 = scalar_lea.vmem [#allocation2], %s439
        %p441 = pneg %p302
        %p442 = pneg %p299
        %s443 = sand.u32 %s30, 1
        %s444 = scalar_lea.sflag [#allocation5], %s443
        %s445 = sand.u32 %s289, 1
        %s446 = smul.addr %s445, 32
        %s447 = scalar_lea.vmem [#allocation4], %s446
        %p448 = pneg %p328
        %p449 = pneg %p325
        %s450 = sand.u32 %s30, 1
        %s451 = scalar_lea.sflag [#allocation5], %s450
        %s452 = sand.u32 %s315, 1
        %s453 = smul.addr %s452, 32
        %s454 = scalar_lea.vmem [#allocation6], %s453
        %p455 = scmp.lt.s32.totalorder %s30, 3
        %s456 = scalar_select %p455, %s30, 3
        %s457 = smul.addr %s456, 8
        %s458 = smul.addr %s457, 8
        %s459 = scalar_lea.vmem %s0, %s458
        %p460 = scmp.lt.s32.totalorder %s30, 3
        %s461 = scalar_select %p460, %s30, 3
        %s462 = smul.addr %s461, 8
        %s463 = smul.addr %s462, 4
        %s464 = scalar_lea.vmem %s1, %s463
        %p465 = scmp.lt.s32.totalorder %s30, 3
        %s466 = scalar_select %p465, %s30, 3
        %s467 = smul.addr %s466, 8
        %s468 = smul.addr %s467, 4
        %s469 = scalar_lea.vmem %s2, %s468
        %v471 = vld [vmem:[%s459] sm:$0xff]
        %v472 = vld [vmem:[%s459 + $0x8] sm:$0xff]
        %v473 = vld [vmem:[%s459 + $0x10] sm:$0xff]
        %v474 = vld [vmem:[%s459 + $0x18] sm:$0xff]
        %v475 = vld [vmem:[%s459 + $0x20] sm:$0xff]
        %v476 = vld [vmem:[%s459 + $0x28] sm:$0xff]
        %v477 = vld [vmem:[%s459 + $0x30] sm:$0xff]
        %v478 = vld [vmem:[%s459 + $0x38] sm:$0xff]
        %vm479 = vcmask 261120
        %v480 = vsel %vm479, %v471, 0.0
        %v481 = vsel %vm479, %v472, 0.0
        %v482 = vadd.f32 %v480, %v481
        %v483 = vsel %vm479, %v473, 0.0
        %v484 = vadd.f32 %v482, %v483
        %v485 = vsel %vm479, %v474, 0.0
        %v486 = vadd.f32 %v484, %v485
        %v487 = vsel %vm479, %v475, 0.0
        %v488 = vadd.f32 %v486, %v487
        %v489 = vsel %vm479, %v476, 0.0
        %v490 = vadd.f32 %v488, %v489
        %v491 = vsel %vm479, %v477, 0.0
        %v492 = vadd.f32 %v490, %v491
        %v493 = vsel %vm479, %v478, 0.0
        %v494 = vadd.f32 %v492, %v493
        %v495 = vrot.slane %v494, 4
        %v496 = vadd.f32 %v494, %v495
        %v497 = vrot.slane %v496, 2
        %v498 = vadd.f32 %v496, %v497
        %v499 = vrot.slane %v498, 1
        %v500 = vadd.f32 %v498, %v499
        %v501 = vmul.f32 %v471, %v471
        %v502 = vmul.f32 %v472, %v472
        %v503 = vmul.f32 %v473, %v473
        %v504 = vmul.f32 %v474, %v474
        %v505 = vmul.f32 %v475, %v475
        %v506 = vmul.f32 %v476, %v476
        %v507 = vmul.f32 %v477, %v477
        %v508 = vmul.f32 %v478, %v478
        %v509 = vsel %vm479, %v501, 0.0
        %v510 = vsel %vm479, %v502, 0.0
        %v511 = vadd.f32 %v509, %v510
        %v512 = vsel %vm479, %v503, 0.0
        %v513 = vadd.f32 %v511, %v512
        %v514 = vsel %vm479, %v504, 0.0
        %v515 = vadd.f32 %v513, %v514
        %v516 = vsel %vm479, %v505, 0.0
        %v517 = vadd.f32 %v515, %v516
        %v518 = vsel %vm479, %v506, 0.0
        %v519 = vadd.f32 %v517, %v518
        %v520 = vsel %vm479, %v507, 0.0
        %v521 = vadd.f32 %v519, %v520
        %v522 = vsel %vm479, %v508, 0.0
        %v523 = vadd.f32 %v521, %v522
        %v524 = vrot.slane %v523, 4
        %v525 = vadd.f32 %v523, %v524
        %v526 = vrot.slane %v525, 2
        %v527 = vadd.f32 %v525, %v526
        %v528 = vrot.slane %v527, 1
        %v529 = vadd.f32 %v527, %v528
        %v530 = vld [vmem:[%s5] sm:$0xff]
        %v531 = vld [vmem:[%s5 + $0x8] sm:$0xff]
        %v532 = vld [vmem:[%s5 + $0x10] sm:$0xff]
        %v533 = vld [vmem:[%s5 + $0x18] sm:$0xff]
        %v535 = vsel %vm479, %v500, 0
        %537 = vmatprep.subr.mxu0 0.0
        %538 = vmatpush1.msra.mxu0 %v530
        %539 = vmatprep.subr.mxu0 0.0
        %540 = vmatpush1.msra.mxu0 %v531
        %541 = vmatprep.subr.mxu0 0.0
        %542 = vmatpush1.msra.mxu0 %v532
        %543 = vmatprep.subr.mxu0 0.0
        %544 = vmatpush1.msra.mxu0 %v533
        %545 = vmatprep.subr.mxu0 0.0
        %546 = vmatpush1.msra.mxu0 0.0
        %547 = vmatprep.subr.mxu0 0.0
        %548 = vmatpush1.msra.mxu0 0.0
        %549 = vmatprep.subr.mxu0 0.0
        %550 = vmatpush1.msra.mxu0 0.0
        %551 = vmatprep.subr.mxu0 0.0
        %552 = vmatpush1.msra.mxu0 0.0
        %553 = vmatprep.subr.mxu0 0.0
        %554 = vmatpush1.msra.mxu0 0.0
        %555 = vmatprep.subr.mxu0 0.0
        %556 = vmatpush1.msra.mxu0 0.0
        %557 = vmatprep.subr.mxu0 0.0
        %558 = vmatpush1.msra.mxu0 0.0
        %559 = vmatprep.subr.mxu0 0.0
        %560 = vmatpush1.msra.mxu0 0.0
        %561 = vmatprep.subr.mxu0 0.0
        %562 = vmatpush1.msra.mxu0 0.0
        %563 = vmatprep.subr.mxu0 0.0
        %564 = vmatpush1.msra.mxu0 0.0
        %565 = vmatprep.subr.mxu0 0.0
        %566 = vmatpush1.msra.mxu0 0.0
        %567 = vmatprep.subr.mxu0 0.0
        %568 = vmatpush1.msra.mxu0 0.0
        %569 = vmatprep.subr.mxu0 0.0
        %570 = vmatpush1.msra.mxu0 0.0
        %571 = vmatprep.subr.mxu0 0.0
        %572 = vmatpush1.msra.mxu0 0.0
        %573 = vmatprep.subr.mxu0 0.0
        %574 = vmatpush1.msra.mxu0 0.0
        %575 = vmatprep.subr.mxu0 0.0
        %576 = vmatpush1.msra.mxu0 0.0
        %577 = vmatprep.subr.mxu0 0.0
        %578 = vmatpush1.msra.mxu0 0.0
        %579 = vmatprep.subr.mxu0 0.0
        %580 = vmatpush1.msra.mxu0 0.0
        %581 = vmatprep.subr.mxu0 0.0
        %582 = vmatpush1.msra.mxu0 0.0
        %583 = vmatprep.subr.mxu0 0.0
        %584 = vmatpush1.msra.mxu0 0.0
        %585 = vmatprep.subr.mxu0 0.0
        %586 = vmatpush1.msra.mxu0 0.0
        %587 = vmatprep.subr.mxu0 0.0
        %588 = vmatpush1.msra.mxu0 0.0
        %589 = vmatprep.subr.mxu0 0.0
        %590 = vmatpush1.msra.mxu0 0.0
        %591 = vmatprep.subr.mxu0 0.0
        %592 = vmatpush1.msra.mxu0 0.0
        %593 = vmatprep.subr.mxu0 0.0
        %594 = vmatpush1.msra.mxu0 0.0
        %595 = vmatprep.subr.mxu0 0.0
        %596 = vmatpush1.msra.mxu0 0.0
        %597 = vmatprep.subr.mxu0 0.0
        %598 = vmatpush1.msra.mxu0 0.0
        %599 = vmatprep.subr.mxu0 0.0
        %600 = vmatpush1.msra.mxu0 0.0
        %601 = vmatprep.mubr.f32.mxu0 0.0
        %602 = vmatmul.mubr.f32.gmra.mrb[0].mxu0 %v535
        %v603 = vpop.f32.mrb[0].mxu0
        %v604 = vadd.f32 0.0, %v603
        %v605 = vpop.f32.mrb[0].mxu0
        %606 = vdwg.mxu0
        %v607 = vmul.f32 %v604, 0.00390625
        %v609 = vsel %vm479, %v529, 0
        %611 = vmatprep.subr.mxu0 0.0
        %612 = vmatpush1.msra.mxu0 %v530
        %613 = vmatprep.subr.mxu0 0.0
        %614 = vmatpush1.msra.mxu0 %v531
        %615 = vmatprep.subr.mxu0 0.0
        %616 = vmatpush1.msra.mxu0 %v532
        %617 = vmatprep.subr.mxu0 0.0
        %618 = vmatpush1.msra.mxu0 %v533
        %619 = vmatprep.subr.mxu0 0.0
        %620 = vmatpush1.msra.mxu0 0.0
        %621 = vmatprep.subr.mxu0 0.0
        %622 = vmatpush1.msra.mxu0 0.0
        %623 = vmatprep.subr.mxu0 0.0
        %624 = vmatpush1.msra.mxu0 0.0
        %625 = vmatprep.subr.mxu0 0.0
        %626 = vmatpush1.msra.mxu0 0.0
        %627 = vmatprep.subr.mxu0 0.0
        %628 = vmatpush1.msra.mxu0 0.0
        %629 = vmatprep.subr.mxu0 0.0
        %630 = vmatpush1.msra.mxu0 0.0
        %631 = vmatprep.subr.mxu0 0.0
        %632 = vmatpush1.msra.mxu0 0.0
        %633 = vmatprep.subr.mxu0 0.0
        %634 = vmatpush1.msra.mxu0 0.0
        %635 = vmatprep.subr.mxu0 0.0
        %636 = vmatpush1.msra.mxu0 0.0
        %637 = vmatprep.subr.mxu0 0.0
        %638 = vmatpush1.msra.mxu0 0.0
        %639 = vmatprep.subr.mxu0 0.0
        %640 = vmatpush1.msra.mxu0 0.0
        %641 = vmatprep.subr.mxu0 0.0
        %642 = vmatpush1.msra.mxu0 0.0
        %643 = vmatprep.subr.mxu0 0.0
        %644 = vmatpush1.msra.mxu0 0.0
        %645 = vmatprep.subr.mxu0 0.0
        %646 = vmatpush1.msra.mxu0 0.0
        %647 = vmatprep.subr.mxu0 0.0
        %648 = vmatpush1.msra.mxu0 0.0
        %649 = vmatprep.subr.mxu0 0.0
        %650 = vmatpush1.msra.mxu0 0.0
        %651 = vmatprep.subr.mxu0 0.0
        %652 = vmatpush1.msra.mxu0 0.0
        %653 = vmatprep.subr.mxu0 0.0
        %654 = vmatpush1.msra.mxu0 0.0
        %655 = vmatprep.subr.mxu0 0.0
        %656 = vmatpush1.msra.mxu0 0.0
        %657 = vmatprep.subr.mxu0 0.0
        %658 = vmatpush1.msra.mxu0 0.0
        %659 = vmatprep.subr.mxu0 0.0
        %660 = vmatpush1.msra.mxu0 0.0
        %661 = vmatprep.subr.mxu0 0.0
        %662 = vmatpush1.msra.mxu0 0.0
        %663 = vmatprep.subr.mxu0 0.0
        %664 = vmatpush1.msra.mxu0 0.0
        %665 = vmatprep.subr.mxu0 0.0
        %666 = vmatpush1.msra.mxu0 0.0
        %667 = vmatprep.subr.mxu0 0.0
        %668 = vmatpush1.msra.mxu0 0.0
        %669 = vmatprep.subr.mxu0 0.0
        %670 = vmatpush1.msra.mxu0 0.0
        %671 = vmatprep.subr.mxu0 0.0
        %672 = vmatpush1.msra.mxu0 0.0
        %673 = vmatprep.subr.mxu0 0.0
        %674 = vmatpush1.msra.mxu0 0.0
        %675 = vmatprep.mubr.f32.mxu0 0.0
        %676 = vmatmul.mubr.f32.gmra.mrb[0].mxu0 %v609
        %v677 = vpop.f32.mrb[0].mxu0
        %v678 = vadd.f32 0.0, %v677
        %v679 = vpop.f32.mrb[0].mxu0
        %680 = vdwg.mxu0
        %v681 = vmul.f32 %v678, 0.00390625
        %v682 = vmul.f32 %v607, %v607
        %v683 = vsub.f32 %v681, %v682
        %v684 = vadd.f32 %v683, 1e-06
        %v685 = vrsqrt.pop %v684
        %vm686 = vcmask 64512
        %v688 = vsel %vm686, %v607, 0
        %v691 = vsel %vm686, %v530, 0
        %v694 = vsel %vm686, %v531, 0
        %v697 = vsel %vm686, %v532, 0
        %v700 = vsel %vm686, %v533, 0
        %702 = vmatprep.subr.mxu0 0.0
        %703 = vmatpush1.xpose.msra.mxu0 %v691
        %704 = vmatprep.subr.mxu0 0.0
        %705 = vmatpush1.xpose.msra.mxu0 %v694
        %706 = vmatprep.subr.mxu0 0.0
        %707 = vmatpush1.xpose.msra.mxu0 %v697
        %708 = vmatprep.subr.mxu0 0.0
        %709 = vmatpush1.xpose.msra.mxu0 %v700
        %710 = vmatprep.subr.mxu0 0.0
        %711 = vmatpush1.xpose.msra.mxu0 0.0
        %712 = vmatprep.subr.mxu0 0.0
        %713 = vmatpush1.xpose.msra.mxu0 0.0
        %714 = vmatprep.subr.mxu0 0.0
        %715 = vmatpush1.xpose.msra.mxu0 0.0
        %716 = vmatprep.subr.mxu0 0.0
        %717 = vmatpush1.xpose.msra.mxu0 0.0
        %718 = vmatprep.subr.mxu0 0.0
        %719 = vmatpush1.xpose.msra.mxu0 0.0
        %720 = vmatprep.subr.mxu0 0.0
        %721 = vmatpush1.xpose.msra.mxu0 0.0
        %722 = vmatprep.subr.mxu0 0.0
        %723 = vmatpush1.xpose.msra.mxu0 0.0
        %724 = vmatprep.subr.mxu0 0.0
        %725 = vmatpush1.xpose.msra.mxu0 0.0
        %726 = vmatprep.subr.mxu0 0.0
        %727 = vmatpush1.xpose.msra.mxu0 0.0
        %728 = vmatprep.subr.mxu0 0.0
        %729 = vmatpush1.xpose.msra.mxu0 0.0
        %730 = vmatprep.subr.mxu0 0.0
        %731 = vmatpush1.xpose.msra.mxu0 0.0
        %732 = vmatprep.subr.mxu0 0.0
        %733 = vmatpush1.xpose.msra.mxu0 0.0
        %734 = vmatprep.subr.mxu0 0.0
        %735 = vmatpush1.xpose.msra.mxu0 0.0
        %736 = vmatprep.subr.mxu0 0.0
        %737 = vmatpush1.xpose.msra.mxu0 0.0
        %738 = vmatprep.subr.mxu0 0.0
        %739 = vmatpush1.xpose.msra.mxu0 0.0
        %740 = vmatprep.subr.mxu0 0.0
        %741 = vmatpush1.xpose.msra.mxu0 0.0
        %742 = vmatprep.subr.mxu0 0.0
        %743 = vmatpush1.xpose.msra.mxu0 0.0
        %744 = vmatprep.subr.mxu0 0.0
        %745 = vmatpush1.xpose.msra.mxu0 0.0
        %746 = vmatprep.subr.mxu0 0.0
        %747 = vmatpush1.xpose.msra.mxu0 0.0
        %748 = vmatprep.subr.mxu0 0.0
        %749 = vmatpush1.xpose.msra.mxu0 0.0
        %750 = vmatprep.subr.mxu0 0.0
        %751 = vmatpush1.xpose.msra.mxu0 0.0
        %752 = vmatprep.subr.mxu0 0.0
        %753 = vmatpush1.xpose.msra.mxu0 0.0
        %754 = vmatprep.subr.mxu0 0.0
        %755 = vmatpush1.xpose.msra.mxu0 0.0
        %756 = vmatprep.subr.mxu0 0.0
        %757 = vmatpush1.xpose.msra.mxu0 0.0
        %758 = vmatprep.subr.mxu0 0.0
        %759 = vmatpush1.xpose.msra.mxu0 0.0
        %760 = vmatprep.subr.mxu0 0.0
        %761 = vmatpush1.xpose.msra.mxu0 0.0
        %762 = vmatprep.subr.mxu0 0.0
        %763 = vmatpush1.xpose.msra.mxu0 0.0
        %764 = vmatprep.subr.mxu0 0.0
        %765 = vmatpush1.xpose.msra.mxu0 0.0
        %766 = vmatprep.mubr.f32.mxu0 0.0
        %767 = vmatmul.mubr.f32.gmra.mrb[0].mxu0 %v688
        %v768 = vpop.f32.mrb[0].mxu0
        %v769 = vadd.f32 0.0, %v768
        %v770 = vpop.f32.mrb[0].mxu0
        %771 = vdwg.mxu0
        %v773 = vsel %vm686, %v685, 0
        %775 = vmatprep.subr.mxu0 0.0
        %776 = vmatpush1.xpose.msra.mxu0 %v691
        %777 = vmatprep.subr.mxu0 0.0
        %778 = vmatpush1.xpose.msra.mxu0 %v694
        %779 = vmatprep.subr.mxu0 0.0
        %780 = vmatpush1.xpose.msra.mxu0 %v697
        %781 = vmatprep.subr.mxu0 0.0
        %782 = vmatpush1.xpose.msra.mxu0 %v700
        %783 = vmatprep.subr.mxu0 0.0
        %784 = vmatpush1.xpose.msra.mxu0 0.0
        %785 = vmatprep.subr.mxu0 0.0
        %786 = vmatpush1.xpose.msra.mxu0 0.0
        %787 = vmatprep.subr.mxu0 0.0
        %788 = vmatpush1.xpose.msra.mxu0 0.0
        %789 = vmatprep.subr.mxu0 0.0
        %790 = vmatpush1.xpose.msra.mxu0 0.0
        %791 = vmatprep.subr.mxu0 0.0
        %792 = vmatpush1.xpose.msra.mxu0 0.0
        %793 = vmatprep.subr.mxu0 0.0
        %794 = vmatpush1.xpose.msra.mxu0 0.0
        %795 = vmatprep.subr.mxu0 0.0
        %796 = vmatpush1.xpose.msra.mxu0 0.0
        %797 = vmatprep.subr.mxu0 0.0
        %798 = vmatpush1.xpose.msra.mxu0 0.0
        %799 = vmatprep.subr.mxu0 0.0
        %800 = vmatpush1.xpose.msra.mxu0 0.0
        %801 = vmatprep.subr.mxu0 0.0
        %802 = vmatpush1.xpose.msra.mxu0 0.0
        %803 = vmatprep.subr.mxu0 0.0
        %804 = vmatpush1.xpose.msra.mxu0 0.0
        %805 = vmatprep.subr.mxu0 0.0
        %806 = vmatpush1.xpose.msra.mxu0 0.0
        %807 = vmatprep.subr.mxu0 0.0
        %808 = vmatpush1.xpose.msra.mxu0 0.0
        %809 = vmatprep.subr.mxu0 0.0
        %810 = vmatpush1.xpose.msra.mxu0 0.0
        %811 = vmatprep.subr.mxu0 0.0
        %812 = vmatpush1.xpose.msra.mxu0 0.0
        %813 = vmatprep.subr.mxu0 0.0
        %814 = vmatpush1.xpose.msra.mxu0 0.0
        %815 = vmatprep.subr.mxu0 0.0
        %816 = vmatpush1.xpose.msra.mxu0 0.0
        %817 = vmatprep.subr.mxu0 0.0
        %818 = vmatpush1.xpose.msra.mxu0 0.0
        %819 = vmatprep.subr.mxu0 0.0
        %820 = vmatpush1.xpose.msra.mxu0 0.0
        %821 = vmatprep.subr.mxu0 0.0
        %822 = vmatpush1.xpose.msra.mxu0 0.0
        %823 = vmatprep.subr.mxu0 0.0
        %824 = vmatpush1.xpose.msra.mxu0 0.0
        %825 = vmatprep.subr.mxu0 0.0
        %826 = vmatpush1.xpose.msra.mxu0 0.0
        %827 = vmatprep.subr.mxu0 0.0
        %828 = vmatpush1.xpose.msra.mxu0 0.0
        %829 = vmatprep.subr.mxu0 0.0
        %830 = vmatpush1.xpose.msra.mxu0 0.0
        %831 = vmatprep.subr.mxu0 0.0
        %832 = vmatpush1.xpose.msra.mxu0 0.0
        %833 = vmatprep.subr.mxu0 0.0
        %834 = vmatpush1.xpose.msra.mxu0 0.0
        %835 = vmatprep.subr.mxu0 0.0
        %836 = vmatpush1.xpose.msra.mxu0 0.0
        %837 = vmatprep.subr.mxu0 0.0
        %838 = vmatpush1.xpose.msra.mxu0 0.0
        %839 = vmatprep.mubr.f32.mxu0 0.0
        %840 = vmatmul.mubr.f32.gmra.mrb[0].mxu0 %v773
        %v841 = vpop.f32.mrb[0].mxu0
        %v842 = vadd.f32 0.0, %v841
        %v843 = vpop.f32.mrb[0].mxu0
        %844 = vdwg.mxu0
        %v845 = vld [vmem:[%s3] sm:$0x1]
        %v846 = vmul.f32 %v845, %v842
        %v847 = vld [vmem:[%s4] sm:$0x1]
        %v848 = vmul.f32 %v769, %v846
        %v849 = vsub.f32 %v847, %v848
        %v851 = vlaneseq
        %v852 = vshrl.u32 %v851, 7
        %v853 = vsub.s32 0, %v852
        %v854 = vrot.slane %v846, %v853
        %v856 = vmul.f32 %v471, %v854
        %v857 = vmul.f32 %v472, %v854
        %v858 = vmul.f32 %v473, %v854
        %v859 = vmul.f32 %v474, %v854
        %v860 = vmul.f32 %v475, %v854
        %v861 = vmul.f32 %v476, %v854
        %v862 = vmul.f32 %v477, %v854
        %v863 = vmul.f32 %v478, %v854
        %v865 = vlaneseq
        %v866 = vshrl.u32 %v865, 7
        %v867 = vsub.s32 0, %v866
        %v868 = vrot.slane %v849, %v867
        %v870 = vadd.f32 %v856, %v868
        %v871 = vadd.f32 %v857, %v868
        %v872 = vadd.f32 %v858, %v868
        %v873 = vadd.f32 %v859, %v868
        %v874 = vadd.f32 %v860, %v868
        %v875 = vadd.f32 %v861, %v868
        %v876 = vadd.f32 %v862, %v868
        %v877 = vadd.f32 %v863, %v868
        %v878 = vpack.c.bf16 %v871, %v870
        %v879 = vpack.c.bf16 %v873, %v872
        %v880 = vpack.c.bf16 %v875, %v874
        %v881 = vpack.c.bf16 %v877, %v876
        %v882 = vld [vmem:[%s6] sm:$0xff]
        %v883 = vld [vmem:[%s6 + $0x8] sm:$0xf]
        %v884 = vld [vmem:[%s6 + $0xc] sm:$0xff]
        %v885 = vld [vmem:[%s6 + $0x14] sm:$0xf]
        %v886 = vld [vmem:[%s6 + $0x18] sm:$0xff]
        %v887 = vld [vmem:[%s6 + $0x20] sm:$0xf]
        %v888 = vld [vmem:[%s6 + $0x24] sm:$0xff]
        %v889 = vld [vmem:[%s6 + $0x2c] sm:$0xf]
        %v890 = vld [vmem:[%s464] sm:$0xf]
        %v891 = vld [vmem:[%s464 + $0x4] sm:$0xf]
        %v892 = vld [vmem:[%s464 + $0x8] sm:$0xf]
        %v893 = vld [vmem:[%s464 + $0xc] sm:$0xf]
        %v894 = vld [vmem:[%s464 + $0x10] sm:$0xf]
        %v895 = vld [vmem:[%s464 + $0x14] sm:$0xf]
        %v896 = vld [vmem:[%s464 + $0x18] sm:$0xf]
        %v897 = vld [vmem:[%s464 + $0x1c] sm:$0xf]
        %v898 = vld [vmem:[%s7] sm:$0xf]
        %v899 = vld [vmem:[%s7 + $0x4] sm:$0xf]
        %v908 = vunpack.c.l.b16 %v890
        %v909 = vunpack.c.l.b16 %v891
        %v910 = vunpack.c.l.b16 %v892
        %v911 = vunpack.c.l.b16 %v893
        %v912 = vunpack.c.l.b16 %v894
        %v913 = vunpack.c.l.b16 %v895
        %v914 = vunpack.c.l.b16 %v896
        %v915 = vunpack.c.l.b16 %v897
        %v916 = vpack.c.b16 %v909, %v908
        %v917 = vpack.c.b16 %v911, %v910
        %v918 = vpack.c.b16 %v913, %v912
        %v919 = vpack.c.b16 %v915, %v914
        %v922 = vunpack.c.l.b16 %v898
        %v923 = vunpack.c.l.b16 %v899
        %v924 = vpack.c.b16 %v923, %v922
        %vm926 = vcmask 130048
        %v928 = vsel %vm926, %v916, 0
        %v931 = vsel %vm926, %v917, 0
        %v934 = vsel %vm926, %v918, 0
        %v937 = vsel %vm926, %v919, 0
        %939 = vmatprep.subr.bf16.mxu0 0
        %940 = vmatpush1.bf16.msra.mxu0 %v924
        %941 = vmatprep.subr.bf16.mxu0 0
        %942 = vmatpush1.bf16.msra.mxu0 0
        %943 = vmatprep.subr.bf16.mxu0 0
        %944 = vmatpush1.bf16.msra.mxu0 0
        %945 = vmatprep.subr.bf16.mxu0 0
        %946 = vmatpush1.bf16.msra.mxu0 0
        %947 = vmatprep.subr.bf16.mxu0 0
        %948 = vmatpush1.bf16.msra.mxu0 0
        %949 = vmatprep.subr.bf16.mxu0 0
        %950 = vmatpush1.bf16.msra.mxu0 0
        %951 = vmatprep.subr.bf16.mxu0 0
        %952 = vmatpush1.bf16.msra.mxu0 0
        %953 = vmatprep.subr.bf16.mxu0 0
        %954 = vmatpush1.bf16.msra.mxu0 0
        %955 = vmatprep.subr.bf16.mxu0 0
        %956 = vmatpush1.bf16.msra.mxu0 0
        %957 = vmatprep.subr.bf16.mxu0 0
        %958 = vmatpush1.bf16.msra.mxu0 0
        %959 = vmatprep.subr.bf16.mxu0 0
        %960 = vmatpush1.bf16.msra.mxu0 0
        %961 = vmatprep.subr.bf16.mxu0 0
        %962 = vmatpush1.bf16.msra.mxu0 0
        %963 = vmatprep.subr.bf16.mxu0 0
        %964 = vmatpush1.bf16.msra.mxu0 0
        %965 = vmatprep.subr.bf16.mxu0 0
        %966 = vmatpush1.bf16.msra.mxu0 0
        %967 = vmatprep.subr.bf16.mxu0 0
        %968 = vmatpush1.bf16.msra.mxu0 0
        %969 = vmatprep.subr.bf16.mxu0 0
        %970 = vmatpush1.bf16.msra.mxu0 0
        %971 = vmatprep.mubr.bf16.mxu0 0
        %972 = vmatmul.mubr.bf16.gmra.mrb[0].mxu0 %v928
        %v973 = vpop.f32.mrb[0].mxu0
        %v974 = vadd.f32 0.0, %v973
        %v975 = vpop.f32.mrb[0].mxu0
        %v976 = vpop.f32.mrb[0].mxu0
        %v977 = vadd.f32 0.0, %v976
        %v978 = vpop.f32.mrb[0].mxu0
        %979 = vmatprep.mubr.bf16.mxu0 0
        %980 = vmatmul.mubr.bf16.gmra.mrb[0].mxu0 %v931
        %v981 = vpop.f32.mrb[0].mxu0
        %v982 = vadd.f32 0.0, %v981
        %v983 = vpop.f32.mrb[0].mxu0
        %v984 = vpop.f32.mrb[0].mxu0
        %v985 = vadd.f32 0.0, %v984
        %v986 = vpop.f32.mrb[0].mxu0
        %987 = vmatprep.mubr.bf16.mxu0 0
        %988 = vmatmul.mubr.bf16.gmra.mrb[0].mxu0 %v934
        %v989 = vpop.f32.mrb[0].mxu0
        %v990 = vadd.f32 0.0, %v989
        %v991 = vpop.f32.mrb[0].mxu0
        %v992 = vpop.f32.mrb[0].mxu0
        %v993 = vadd.f32 0.0, %v992
        %v994 = vpop.f32.mrb[0].mxu0
        %995 = vmatprep.mubr.bf16.mxu0 0
        %996 = vmatmul.mubr.bf16.gmra.mrb[0].mxu0 %v937
        %v997 = vpop.f32.mrb[0].mxu0
        %v998 = vadd.f32 0.0, %v997
        %v999 = vpop.f32.mrb[0].mxu0
        %v1000 = vpop.f32.mrb[0].mxu0
        %v1001 = vadd.f32 0.0, %v1000
        %v1002 = vpop.f32.mrb[0].mxu0
        %1003 = vdwg.mxu0
        %v1004 = vld [vmem:[%s469] sm:$0xf]
        %v1005 = vld [vmem:[%s469 + $0x4] sm:$0xf]
        %v1006 = vld [vmem:[%s469 + $0x8] sm:$0xf]
        %v1007 = vld [vmem:[%s469 + $0xc] sm:$0xf]
        %v1008 = vld [vmem:[%s469 + $0x10] sm:$0xf]
        %v1009 = vld [vmem:[%s469 + $0x14] sm:$0xf]
        %v1010 = vld [vmem:[%s469 + $0x18] sm:$0xf]
        %v1011 = vld [vmem:[%s469 + $0x1c] sm:$0xf]
        %v1012 = vld [vmem:[%s8] sm:$0xff]
        %v1013 = vld [vmem:[%s8 + $0x8] sm:$0xff]
        %v1022 = vunpack.c.l.b16 %v1004
        %v1023 = vunpack.c.l.b16 %v1005
        %v1024 = vunpack.c.l.b16 %v1006
        %v1025 = vunpack.c.l.b16 %v1007
        %v1026 = vunpack.c.l.b16 %v1008
        %v1027 = vunpack.c.l.b16 %v1009
        %v1028 = vunpack.c.l.b16 %v1010
        %v1029 = vunpack.c.l.b16 %v1011
        %v1030 = vpack.c.b16 %v1023, %v1022
        %v1031 = vpack.c.b16 %v1025, %v1024
        %v1032 = vpack.c.b16 %v1027, %v1026
        %v1033 = vpack.c.b16 %v1029, %v1028
        %v1036 = vunpack.c.l.b16 %v1012
        %v1037 = vunpack.c.h.b16 %v1012
        %v1038 = vunpack.c.l.b16 %v1013
        %v1039 = vunpack.c.h.b16 %v1013
        %v1040 = vpack.c.b16 %v1038, %v1036
        %v1041 = vpack.c.b16 %v1039, %v1037
        %v1045 = vsel %vm926, %v1030, 0
        %v1048 = vsel %vm926, %v1031, 0
        %v1051 = vsel %vm926, %v1032, 0
        %v1054 = vsel %vm926, %v1033, 0
        %1056 = vmatprep.subr.bf16.mxu0 %v1041
        %1057 = vmatpush1.bf16.msra.mxu0 %v1040
        %1058 = vmatprep.subr.bf16.mxu0 0
        %1059 = vmatpush1.bf16.msra.mxu0 0
        %1060 = vmatprep.subr.bf16.mxu0 0
        %1061 = vmatpush1.bf16.msra.mxu0 0
        %1062 = vmatprep.subr.bf16.mxu0 0
        %1063 = vmatpush1.bf16.msra.mxu0 0
        %1064 = vmatprep.subr.bf16.mxu0 0
        %1065 = vmatpush1.bf16.msra.mxu0 0
        %1066 = vmatprep.subr.bf16.mxu0 0
        %1067 = vmatpush1.bf16.msra.mxu0 0
        %1068 = vmatprep.subr.bf16.mxu0 0
        %1069 = vmatpush1.bf16.msra.mxu0 0
        %1070 = vmatprep.subr.bf16.mxu0 0
        %1071 = vmatpush1.bf16.msra.mxu0 0
        %1072 = vmatprep.subr.bf16.mxu0 0
        %1073 = vmatpush1.bf16.msra.mxu0 0
        %1074 = vmatprep.subr.bf16.mxu0 0
        %1075 = vmatpush1.bf16.msra.mxu0 0
        %1076 = vmatprep.subr.bf16.mxu0 0
        %1077 = vmatpush1.bf16.msra.mxu0 0
        %1078 = vmatprep.subr.bf16.mxu0 0
        %1079 = vmatpush1.bf16.msra.mxu0 0
        %1080 = vmatprep.subr.bf16.mxu0 0
        %1081 = vmatpush1.bf16.msra.mxu0 0
        %1082 = vmatprep.subr.bf16.mxu0 0
        %1083 = vmatpush1.bf16.msra.mxu0 0
        %1084 = vmatprep.subr.bf16.mxu0 0
        %1085 = vmatpush1.bf16.msra.mxu0 0
        %1086 = vmatprep.subr.bf16.mxu0 0
        %1087 = vmatpush1.bf16.msra.mxu0 0
        %1088 = vmatprep.mubr.bf16.mxu0 0
        %1089 = vmatmul.mubr.bf16.gmra.mrb[0].mxu0 %v1045
        %v1090 = vpop.f32.mrb[0].mxu0
        %v1091 = vadd.f32 0.0, %v1090
        %v1092 = vpop.f32.mrb[0].mxu0
        %v1093 = vadd.f32 0.0, %v1092
        %v1094 = vpop.f32.mrb[0].mxu0
        %v1095 = vadd.f32 0.0, %v1094
        %v1096 = vpop.f32.mrb[0].mxu0
        %v1097 = vadd.f32 0.0, %v1096
        %1098 = vmatprep.mubr.bf16.mxu0 0
        %1099 = vmatmul.mubr.bf16.gmra.mrb[0].mxu0 %v1048
        %v1100 = vpop.f32.mrb[0].mxu0
        %v1101 = vadd.f32 0.0, %v1100
        %v1102 = vpop.f32.mrb[0].mxu0
        %v1103 = vadd.f32 0.0, %v1102
        %v1104 = vpop.f32.mrb[0].mxu0
        %v1105 = vadd.f32 0.0, %v1104
        %v1106 = vpop.f32.mrb[0].mxu0
        %v1107 = vadd.f32 0.0, %v1106
        %1108 = vmatprep.mubr.bf16.mxu0 0
        %1109 = vmatmul.mubr.bf16.gmra.mrb[0].mxu0 %v1051
        %v1110 = vpop.f32.mrb[0].mxu0
        %v1111 = vadd.f32 0.0, %v1110
        %v1112 = vpop.f32.mrb[0].mxu0
        %v1113 = vadd.f32 0.0, %v1112
        %v1114 = vpop.f32.mrb[0].mxu0
        %v1115 = vadd.f32 0.0, %v1114
        %v1116 = vpop.f32.mrb[0].mxu0
        %v1117 = vadd.f32 0.0, %v1116
        %1118 = vmatprep.mubr.bf16.mxu0 0
        %1119 = vmatmul.mubr.bf16.gmra.mrb[0].mxu0 %v1054
        %v1120 = vpop.f32.mrb[0].mxu0
        %v1121 = vadd.f32 0.0, %v1120
        %v1122 = vpop.f32.mrb[0].mxu0
        %v1123 = vadd.f32 0.0, %v1122
        %v1124 = vpop.f32.mrb[0].mxu0
        %v1125 = vadd.f32 0.0, %v1124
        %v1126 = vpop.f32.mrb[0].mxu0
        %v1127 = vadd.f32 0.0, %v1126
        %1128 = vdwg.mxu0
        %v1137 = vunpack.c.l.b16 %v882
        %v1138 = vunpack.c.h.b16 %v882
        %v1139 = vunpack.c.l.b16 %v883
        %v1140 = vunpack.c.l.b16 %v884
        %v1141 = vunpack.c.h.b16 %v884
        %v1142 = vunpack.c.l.b16 %v885
        %v1143 = vunpack.c.l.b16 %v886
        %v1144 = vunpack.c.h.b16 %v886
        %v1145 = vunpack.c.l.b16 %v887
        %v1146 = vunpack.c.l.b16 %v888
        %v1147 = vunpack.c.h.b16 %v888
        %v1148 = vunpack.c.l.b16 %v889
        %v1149 = vpack.c.b16 %v1140, %v1137
        %v1150 = vpack.c.b16 %v1141, %v1138
        %v1151 = vpack.c.b16 %v1142, %v1139
        %v1152 = vpack.c.b16 %v1146, %v1143
        %v1153 = vpack.c.b16 %v1147, %v1144
        %v1154 = vpack.c.b16 %v1148, %v1145
        %v1162 = vsel %vm479, %v878, 0
        %v1165 = vsel %vm479, %v879, 0
        %v1168 = vsel %vm479, %v880, 0
        %v1171 = vsel %vm479, %v881, 0
        %1173 = vmatprep.subr.bf16.mxu0 %v1150
        %1174 = vmatpush1.bf16.msra.mxu0 %v1149
        %1175 = vmatprep.subr.bf16.mxu0 %v1153
        %1176 = vmatpush1.bf16.msra.mxu0 %v1152
        %1177 = vmatprep.subr.bf16.mxu0 0
        %1178 = vmatpush1.bf16.msra.mxu0 0
        %1179 = vmatprep.subr.bf16.mxu0 0
        %1180 = vmatpush1.bf16.msra.mxu0 0
        %1181 = vmatprep.subr.bf16.mxu0 0
        %1182 = vmatpush1.bf16.msra.mxu0 0
        %1183 = vmatprep.subr.bf16.mxu0 0
        %1184 = vmatpush1.bf16.msra.mxu0 0
        %1185 = vmatprep.subr.bf16.mxu0 0
        %1186 = vmatpush1.bf16.msra.mxu0 0
        %1187 = vmatprep.subr.bf16.mxu0 0
        %1188 = vmatpush1.bf16.msra.mxu0 0
        %1189 = vmatprep.subr.bf16.mxu0 0
        %1190 = vmatpush1.bf16.msra.mxu0 0
        %1191 = vmatprep.subr.bf16.mxu0 0
        %1192 = vmatpush1.bf16.msra.mxu0 0
        %1193 = vmatprep.subr.bf16.mxu0 0
        %1194 = vmatpush1.bf16.msra.mxu0 0
        %1195 = vmatprep.subr.bf16.mxu0 0
        %1196 = vmatpush1.bf16.msra.mxu0 0
        %1197 = vmatprep.subr.bf16.mxu0 0
        %1198 = vmatpush1.bf16.msra.mxu0 0
        %1199 = vmatprep.subr.bf16.mxu0 0
        %1200 = vmatpush1.bf16.msra.mxu0 0
        %1201 = vmatprep.subr.bf16.mxu0 0
        %1202 = vmatpush1.bf16.msra.mxu0 0
        %1203 = vmatprep.subr.bf16.mxu0 0
        %1204 = vmatpush1.bf16.msra.mxu0 0
        %1205 = vmatprep.mubr.bf16.mxu0 0
        %1206 = vmatmul.mubr.bf16.gmra.mrb[0].mxu0 %v1162
        %v1207 = vpop.f32.mrb[0].mxu0
        %v1208 = vadd.f32 %v974, %v1207
        %v1209 = vpop.f32.mrb[0].mxu0
        %v1210 = vadd.f32 %v1091, %v1209
        %v1211 = vpop.f32.mrb[0].mxu0
        %v1212 = vadd.f32 %v977, %v1211
        %v1213 = vpop.f32.mrb[0].mxu0
        %v1214 = vadd.f32 %v1095, %v1213
        %1215 = vmatprep.mubr.bf16.mxu0 0
        %1216 = vmatmul.mubr.bf16.gmra.mrb[0].mxu0 %v1165
        %v1217 = vpop.f32.mrb[0].mxu0
        %v1218 = vadd.f32 %v982, %v1217
        %v1219 = vpop.f32.mrb[0].mxu0
        %v1220 = vadd.f32 %v1101, %v1219
        %v1221 = vpop.f32.mrb[0].mxu0
        %v1222 = vadd.f32 %v985, %v1221
        %v1223 = vpop.f32.mrb[0].mxu0
        %v1224 = vadd.f32 %v1105, %v1223
        %1225 = vmatprep.mubr.bf16.mxu0 0
        %1226 = vmatmul.mubr.bf16.gmra.mrb[0].mxu0 %v1168
        %v1227 = vpop.f32.mrb[0].mxu0
        %v1228 = vadd.f32 %v990, %v1227
        %v1229 = vpop.f32.mrb[0].mxu0
        %v1230 = vadd.f32 %v1111, %v1229
        %v1231 = vpop.f32.mrb[0].mxu0
        %v1232 = vadd.f32 %v993, %v1231
        %v1233 = vpop.f32.mrb[0].mxu0
        %v1234 = vadd.f32 %v1115, %v1233
        %1235 = vmatprep.mubr.bf16.mxu0 0
        %1236 = vmatmul.mubr.bf16.gmra.mrb[0].mxu0 %v1171
        %v1237 = vpop.f32.mrb[0].mxu0
        %v1238 = vadd.f32 %v998, %v1237
        %v1239 = vpop.f32.mrb[0].mxu0
        %v1240 = vadd.f32 %v1121, %v1239
        %v1241 = vpop.f32.mrb[0].mxu0
        %v1242 = vadd.f32 %v1001, %v1241
        %v1243 = vpop.f32.mrb[0].mxu0
        %v1244 = vadd.f32 %v1125, %v1243
        %1245 = vdwg.mxu0
        %1246 = vmatprep.subr.bf16.mxu0 0
        %1247 = vmatpush1.bf16.msra.mxu0 %v1151
        %1248 = vmatprep.subr.bf16.mxu0 0
        %1249 = vmatpush1.bf16.msra.mxu0 %v1154
        %1250 = vmatprep.subr.bf16.mxu0 0
        %1251 = vmatpush1.bf16.msra.mxu0 0
        %1252 = vmatprep.subr.bf16.mxu0 0
        %1253 = vmatpush1.bf16.msra.mxu0 0
        %1254 = vmatprep.subr.bf16.mxu0 0
        %1255 = vmatpush1.bf16.msra.mxu0 0
        %1256 = vmatprep.subr.bf16.mxu0 0
        %1257 = vmatpush1.bf16.msra.mxu0 0
        %1258 = vmatprep.subr.bf16.mxu0 0
        %1259 = vmatpush1.bf16.msra.mxu0 0
        %1260 = vmatprep.subr.bf16.mxu0 0
        %1261 = vmatpush1.bf16.msra.mxu0 0
        %1262 = vmatprep.subr.bf16.mxu0 0
        %1263 = vmatpush1.bf16.msra.mxu0 0
        %1264 = vmatprep.subr.bf16.mxu0 0
        %1265 = vmatpush1.bf16.msra.mxu0 0
        %1266 = vmatprep.subr.bf16.mxu0 0
        %1267 = vmatpush1.bf16.msra.mxu0 0
        %1268 = vmatprep.subr.bf16.mxu0 0
        %1269 = vmatpush1.bf16.msra.mxu0 0
        %1270 = vmatprep.subr.bf16.mxu0 0
        %1271 = vmatpush1.bf16.msra.mxu0 0
        %1272 = vmatprep.subr.bf16.mxu0 0
        %1273 = vmatpush1.bf16.msra.mxu0 0
        %1274 = vmatprep.subr.bf16.mxu0 0
        %1275 = vmatpush1.bf16.msra.mxu0 0
        %1276 = vmatprep.subr.bf16.mxu0 0
        %1277 = vmatpush1.bf16.msra.mxu0 0
        %1278 = vmatprep.mubr.bf16.mxu0 0
        %1279 = vmatmul.mubr.bf16.gmra.mrb[0].mxu0 %v1162
        %v1280 = vpop.f32.mrb[0].mxu0
        %v1281 = vadd.f32 %v1093, %v1280
        %v1282 = vpop.f32.mrb[0].mxu0
        %v1283 = vpop.f32.mrb[0].mxu0
        %v1284 = vadd.f32 %v1097, %v1283
        %v1285 = vpop.f32.mrb[0].mxu0
        %1286 = vmatprep.mubr.bf16.mxu0 0
        %1287 = vmatmul.mubr.bf16.gmra.mrb[0].mxu0 %v1165
        %v1288 = vpop.f32.mrb[0].mxu0
        %v1289 = vadd.f32 %v1103, %v1288
        %v1290 = vpop.f32.mrb[0].mxu0
        %v1291 = vpop.f32.mrb[0].mxu0
        %v1292 = vadd.f32 %v1107, %v1291
        %v1293 = vpop.f32.mrb[0].mxu0
        %1294 = vmatprep.mubr.bf16.mxu0 0
        %1295 = vmatmul.mubr.bf16.gmra.mrb[0].mxu0 %v1168
        %v1296 = vpop.f32.mrb[0].mxu0
        %v1297 = vadd.f32 %v1113, %v1296
        %v1298 = vpop.f32.mrb[0].mxu0
        %v1299 = vpop.f32.mrb[0].mxu0
        %v1300 = vadd.f32 %v1117, %v1299
        %v1301 = vpop.f32.mrb[0].mxu0
        %1302 = vmatprep.mubr.bf16.mxu0 0
        %1303 = vmatmul.mubr.bf16.gmra.mrb[0].mxu0 %v1171
        %v1304 = vpop.f32.mrb[0].mxu0
        %v1305 = vadd.f32 %v1123, %v1304
        %v1306 = vpop.f32.mrb[0].mxu0
        %v1307 = vpop.f32.mrb[0].mxu0
        %v1308 = vadd.f32 %v1127, %v1307
        %v1309 = vpop.f32.mrb[0].mxu0
        %1310 = vdwg.mxu0
        %v1311 = vld [vmem:[%s9] sm:$0x7]
        %v1313 = vlaneseq
        %v1314 = vshrl.u32 %v1313, 7
        %v1315 = vsub.s32 0, %v1314
        %v1316 = vrot.slane %v1311, %v1315
        %v1317 = vlaneseq
        %v1318 = vshrl.u32 %v1317, 7
        %v1319 = vsub.s32 1, %v1318
        %v1320 = vrot.slane %v1311, %v1319
        %v1321 = vlaneseq
        %v1322 = vshrl.u32 %v1321, 7
        %v1323 = vsub.s32 2, %v1322
        %v1324 = vrot.slane %v1311, %v1323
        %v1328 = vadd.f32 %v1208, %v1316
        %v1329 = vadd.f32 %v1210, %v1320
        %v1330 = vadd.f32 %v1281, %v1324
        %v1331 = vadd.f32 %v1212, %v1316
        %v1332 = vadd.f32 %v1214, %v1320
        %v1333 = vadd.f32 %v1284, %v1324
        %v1334 = vadd.f32 %v1218, %v1316
        %v1335 = vadd.f32 %v1220, %v1320
        %v1336 = vadd.f32 %v1289, %v1324
        %v1337 = vadd.f32 %v1222, %v1316
        %v1338 = vadd.f32 %v1224, %v1320
        %v1339 = vadd.f32 %v1292, %v1324
        %v1340 = vadd.f32 %v1228, %v1316
        %v1341 = vadd.f32 %v1230, %v1320
        %v1342 = vadd.f32 %v1297, %v1324
        %v1343 = vadd.f32 %v1232, %v1316
        %v1344 = vadd.f32 %v1234, %v1320
        %v1345 = vadd.f32 %v1300, %v1324
        %v1346 = vadd.f32 %v1238, %v1316
        %v1347 = vadd.f32 %v1240, %v1320
        %v1348 = vadd.f32 %v1305, %v1324
        %v1349 = vadd.f32 %v1242, %v1316
        %v1350 = vadd.f32 %v1244, %v1320
        %v1351 = vadd.f32 %v1308, %v1324
        %v1352 = vpack.c.bf16 %v1331, %v1328
        %v1353 = vpack.c.bf16 %v1337, %v1334
        %v1354 = vpack.c.bf16 %v1343, %v1340
        %v1355 = vpack.c.bf16 %v1349, %v1346
        %v1360 = vunpack.c.l.b16 %v1352
        %v1361 = vunpack.c.h.b16 %v1352
        %v1362 = vunpack.c.l.b16 %v1353
        %v1363 = vunpack.c.h.b16 %v1353
        %v1364 = vunpack.c.l.b16 %v1354
        %v1365 = vunpack.c.h.b16 %v1354
        %v1366 = vunpack.c.l.b16 %v1355
        %v1367 = vunpack.c.h.b16 %v1355
        %v1368 = vpack.c.b16 %v1360, %v1360
        %v1369 = vpack.c.b16 %v1361, %v1361
        %v1370 = vpack.c.b16 %v1362, %v1362
        %v1371 = vpack.c.b16 %v1363, %v1363
        %v1372 = vpack.c.b16 %v1364, %v1364
        %v1373 = vpack.c.b16 %v1365, %v1365
        %v1374 = vpack.c.b16 %v1366, %v1366
        %v1375 = vpack.c.b16 %v1367, %v1367
        %1384 = vst [vmem:[%s440] sm:$0xf] %v1368
        %1385 = vst [vmem:[%s440 + $0x4] sm:$0xf] %v1369
        %1386 = vst [vmem:[%s440 + $0x8] sm:$0xf] %v1370
        %1387 = vst [vmem:[%s440 + $0xc] sm:$0xf] %v1371
        %1388 = vst [vmem:[%s440 + $0x10] sm:$0xf] %v1372
        %1389 = vst [vmem:[%s440 + $0x14] sm:$0xf] %v1373
        %1390 = vst [vmem:[%s440 + $0x18] sm:$0xf] %v1374
        %1391 = vst [vmem:[%s440 + $0x1c] sm:$0xf] %v1375
        %v1392 = vpack.c.bf16 %v1332, %v1329
        %v1393 = vpack.c.bf16 %v1338, %v1335
        %v1394 = vpack.c.bf16 %v1344, %v1341
        %v1395 = vpack.c.bf16 %v1350, %v1347
        %v1400 = vunpack.c.l.b16 %v1392
        %v1401 = vunpack.c.h.b16 %v1392
        %v1402 = vunpack.c.l.b16 %v1393
        %v1403 = vunpack.c.h.b16 %v1393
        %v1404 = vunpack.c.l.b16 %v1394
        %v1405 = vunpack.c.h.b16 %v1394
        %v1406 = vunpack.c.l.b16 %v1395
        %v1407 = vunpack.c.h.b16 %v1395
        %v1408 = vpack.c.b16 %v1400, %v1400
        %v1409 = vpack.c.b16 %v1401, %v1401
        %v1410 = vpack.c.b16 %v1402, %v1402
        %v1411 = vpack.c.b16 %v1403, %v1403
        %v1412 = vpack.c.b16 %v1404, %v1404
        %v1413 = vpack.c.b16 %v1405, %v1405
        %v1414 = vpack.c.b16 %v1406, %v1406
        %v1415 = vpack.c.b16 %v1407, %v1407
        %1424 = vst [vmem:[%s447] sm:$0xf] %v1408
        %1425 = vst [vmem:[%s447 + $0x4] sm:$0xf] %v1409
        %1426 = vst [vmem:[%s447 + $0x8] sm:$0xf] %v1410
        %1427 = vst [vmem:[%s447 + $0xc] sm:$0xf] %v1411
        %1428 = vst [vmem:[%s447 + $0x10] sm:$0xf] %v1412
        %1429 = vst [vmem:[%s447 + $0x14] sm:$0xf] %v1413
        %1430 = vst [vmem:[%s447 + $0x18] sm:$0xf] %v1414
        %1431 = vst [vmem:[%s447 + $0x1c] sm:$0xf] %v1415
        %v1432 = vpack.c.bf16 %v1333, %v1330
        %v1433 = vpack.c.bf16 %v1339, %v1336
        %v1434 = vpack.c.bf16 %v1345, %v1342
        %v1435 = vpack.c.bf16 %v1351, %v1348
        %v1440 = vunpack.c.l.b16 %v1432
        %v1441 = vunpack.c.h.b16 %v1432
        %v1442 = vunpack.c.l.b16 %v1433
        %v1443 = vunpack.c.h.b16 %v1433
        %v1444 = vunpack.c.l.b16 %v1434
        %v1445 = vunpack.c.h.b16 %v1434
        %v1446 = vunpack.c.l.b16 %v1435
        %v1447 = vunpack.c.h.b16 %v1435
        %v1448 = vpack.c.b16 %v1440, %v1440
        %v1449 = vpack.c.b16 %v1441, %v1441
        %v1450 = vpack.c.b16 %v1442, %v1442
        %v1451 = vpack.c.b16 %v1443, %v1443
        %v1452 = vpack.c.b16 %v1444, %v1444
        %v1453 = vpack.c.b16 %v1445, %v1445
        %v1454 = vpack.c.b16 %v1446, %v1446
        %v1455 = vpack.c.b16 %v1447, %v1447
        %1464 = vst [vmem:[%s454] sm:$0xf] %v1448
        %1465 = vst [vmem:[%s454 + $0x4] sm:$0xf] %v1449
        %1466 = vst [vmem:[%s454 + $0x8] sm:$0xf] %v1450
        %1467 = vst [vmem:[%s454 + $0xc] sm:$0xf] %v1451
        %1468 = vst [vmem:[%s454 + $0x10] sm:$0xf] %v1452
        %1469 = vst [vmem:[%s454 + $0x14] sm:$0xf] %v1453
        %1470 = vst [vmem:[%s454 + $0x18] sm:$0xf] %v1454
        %1471 = vst [vmem:[%s454 + $0x1c] sm:$0xf] %v1455
        %s1472 = sand.u32 %s263, 1
        %s1473 = scalar_lea.sflag [#allocation3], %s1472
        %s1474 = sand.u32 %s263, 1
        %s1475 = smul.addr %s1474, 32
        %s1476 = scalar_lea.vmem [#allocation2], %s1475
        %s1477 = sand.u32 %s30, 1
        %s1478 = scalar_lea.sflag [#allocation5], %s1477
        %s1479 = sand.u32 %s289, 1
        %s1480 = smul.addr %s1479, 32
        %s1481 = scalar_lea.vmem [#allocation4], %s1480
        %s1482 = sand.u32 %s30, 1
        %s1483 = scalar_lea.sflag [#allocation5], %s1482
        %s1484 = sand.u32 %s315, 1
        %s1485 = smul.addr %s1484, 32
        %s1486 = scalar_lea.vmem [#allocation6], %s1485
        // Predicated region
        $region61: #{tpu_custom_call.1} parent=59 // pred_check
          %p1487 = pneg %p273
        $region62: #{tpu_custom_call.1} parent=59 // pred_check_branch
          %1489 = sbr.rel (%p1487) target = $region64
        $region63: #{tpu_custom_call.1} parent=59 // pred_region
          %s1491 = ssub.s32 512, 512
          %1492 = vsyncadd %s1473, %s1491
          %s1493 = smul.addr %s30, 8
          %s1494 = smul.addr %s1493, 64
          %s1495 = scalar_lea.hbm %s10, %s1494
          %s1496 = sshll.u32 %s1476, 4
          %s1497 = int_to_ptr.vmem [resolvable:$true] %s1496
          %1502 = dma.vmem_to_hbm [thread:$0]  %s1497, 512, %s1495, %s1473, 64, 64, 4
        $region64: #{tpu_custom_call.1} parent=59 // pred_fallthru
          _
        // Predicated region
        $region65: #{tpu_custom_call.1} parent=59 // pred_check
          %p1503 = pneg %p299
        $region66: #{tpu_custom_call.1} parent=59 // pred_check_branch
          %1505 = sbr.rel (%p1503) target = $region68
        $region67: #{tpu_custom_call.1} parent=59 // pred_region
          %s1507 = ssub.s32 512, 512
          %1508 = vsyncadd %s1478, %s1507
          %s1509 = smul.addr %s30, 8
          %s1510 = smul.addr %s1509, 64
          %s1511 = scalar_lea.hbm %s11, %s1510
          %s1512 = sshll.u32 %s1481, 4
          %s1513 = int_to_ptr.vmem [resolvable:$true] %s1512
          %1518 = dma.vmem_to_hbm [thread:$0]  %s1513, 512, %s1511, %s1478, 64, 64, 4
        $region68: #{tpu_custom_call.1} parent=59 // pred_fallthru
          _
        // Predicated region
        $region69: #{tpu_custom_call.1} parent=59 // pred_check
          %p1519 = pneg %p325
        $region70: #{tpu_custom_call.1} parent=59 // pred_check_branch
          %1521 = sbr.rel (%p1519) target = $region72
        $region71: #{tpu_custom_call.1} parent=59 // pred_region
          %s1523 = ssub.s32 512, 512
          %1524 = vsyncadd %s1483, %s1523
          %s1525 = smul.addr %s30, 8
          %s1526 = smul.addr %s1525, 64
          %s1527 = scalar_lea.hbm %s12, %s1526
          %s1528 = sshll.u32 %s1486, 4
          %s1529 = int_to_ptr.vmem [resolvable:$true] %s1528
          %1534 = dma.vmem_to_hbm [thread:$0]  %s1529, 512, %s1527, %s1483, 64, 64, 4
        $region72: #{tpu_custom_call.1} parent=59 // pred_fallthru
          _
      $region60: #{tpu_custom_call.1} parent=5 // pred_fallthru
        _
      %p1535 = scmp.le.s32.totalorder 2, %s25
      // Predicated region
      $region73: #{tpu_custom_call.1} parent=5 // pred_check
        %p1536 = pneg %p1535
      $region74: #{tpu_custom_call.1} parent=5 // pred_check_branch
        %1538 = sbr.rel (%p1536) target = $region76
      $region75: #{tpu_custom_call.1} parent=5 // pred_region
        %s1539 = ssub.s32 %s25, 2
        // Predicated region
        $region77: #{tpu_custom_call.1} parent=75 // pred_check
          %p1540 = pneg %p279
        $region78: #{tpu_custom_call.1} parent=75 // pred_check_branch
          %1542 = sbr.rel (%p1540) target = $region80
        $region79: #{tpu_custom_call.1} parent=75 // pred_region
          %s1543 = sand.u32 %s264, 1
          %s1544 = scalar_lea.sflag [#allocation3], %s1543
          %s1545 = sand.u32 %s264, 1
          %s1546 = smul.addr %s1545, 32
          %s1547 = scalar_lea.vmem [#allocation2], %s1546
          %1548 = dma.done %s1544, 512
        $region80: #{tpu_custom_call.1} parent=75 // pred_fallthru
          _
        // Predicated region
        $region81: #{tpu_custom_call.1} parent=75 // pred_check
          %p1549 = pneg %p305
        $region82: #{tpu_custom_call.1} parent=75 // pred_check_branch
          %1551 = sbr.rel (%p1549) target = $region84
        $region83: #{tpu_custom_call.1} parent=75 // pred_region
          %s1552 = sand.u32 %s31, 1
          %s1553 = scalar_lea.sflag [#allocation5], %s1552
          %s1554 = sand.u32 %s290, 1
          %s1555 = smul.addr %s1554, 32
          %s1556 = scalar_lea.vmem [#allocation4], %s1555
          %1557 = dma.done %s1553, 512
        $region84: #{tpu_custom_call.1} parent=75 // pred_fallthru
          _
        // Predicated region
        $region85: #{tpu_custom_call.1} parent=75 // pred_check
          %p1558 = pneg %p331
        $region86: #{tpu_custom_call.1} parent=75 // pred_check_branch
          %1560 = sbr.rel (%p1558) target = $region88
        $region87: #{tpu_custom_call.1} parent=75 // pred_region
          %s1561 = sand.u32 %s31, 1
          %s1562 = scalar_lea.sflag [#allocation5], %s1561
          %s1563 = sand.u32 %s316, 1
          %s1564 = smul.addr %s1563, 32
          %s1565 = scalar_lea.vmem [#allocation6], %s1564
          %1566 = dma.done %s1562, 512
        $region88: #{tpu_custom_call.1} parent=75 // pred_fallthru
          _
      $region76: #{tpu_custom_call.1} parent=5 // pred_fallthru
        _
    $region6: #{tpu_custom_call.1} parent=1 // loop_footer
      %s29 = sadd.s32 1, %s25
    $region7: #{tpu_custom_call.1} parent=1 // loop_footer_branch
      %24 = sbr.rel target = $region3
    $region8: #{tpu_custom_call.1} parent=1 // loop_exit
      _
    %1567 = vsyncpa [#allocation3], 1
    %s1568 = scalar_lea.sflag [#allocation3], 1
    %1569 = vsyncpa %s1568, 1
    %1570 = vsyncpa [#allocation5], 1
    %s1571 = scalar_lea.sflag [#allocation5], 1
    %1572 = vsyncpa %s1571, 1

</llo_original>
